<compile_context>
chip_gen: v7x
topology: tpu7x:2x2x1
jax: 0.10.0
libtpu: 0.0.40
codegen_flags: <defaults>
</compile_context>

<pallas_src>
import functools
import math

import jax
import jax.numpy as jnp
from jax import lax
from jax.experimental import pallas as pl
from jax.experimental.pallas import tpu as pltpu

_MIB = 1024 * 1024
_LANES = 128


def _layernorm_kernel(x_ref, a_ref, b_ref, o_ref, *, eps: float, n_valid: int):
    # x_ref: (TM, F_pad) tile of rows; a_ref/b_ref: (1, F_pad) scale/shift.
    x = x_ref[...].astype(jnp.float32)
    f_pad = x.shape[-1]

    # Column-selector vector: 1.0 on the n_valid true features, 0.0 on the
    # zero-padded lanes.  Doing the row reductions as matmuls against this
    # vector puts them on the (otherwise idle) MXU and off the XLU/VALU slots;
    # HIGHEST precision keeps full f32 accuracy (the self-test asserts 1e-5).
    if n_valid == f_pad:
        colsel = jnp.ones((f_pad, 1), dtype=jnp.float32)
    else:
        colsel = (lax.broadcasted_iota(jnp.int32, (f_pad, 1), 0) < n_valid
                  ).astype(jnp.float32)

    mean = jnp.dot(x, colsel, precision=lax.Precision.HIGHEST,
                   preferred_element_type=jnp.float32) * (1.0 / n_valid)
    diff = x - mean
    # torch.std default: unbiased estimator (divide by N-1).  Padded columns
    # contribute 0 via colsel, so the centered two-pass variance stays exact.
    var = jnp.dot(diff * diff, colsel, precision=lax.Precision.HIGHEST,
                  preferred_element_type=jnp.float32) * (1.0 / (n_valid - 1))
    std = jnp.sqrt(var)
    # Exact reciprocal on a (TM, 1) column; approx=True would gain nothing.
    inv = pl.reciprocal(std + eps, approx=False)

    a = a_ref[...].astype(jnp.float32)
    b = b_ref[...].astype(jnp.float32)
    o_ref[...] = (a * (diff * inv) + b).astype(o_ref.dtype)


def _sublane_multiple(dtype) -> int:
    # 32-bit -> 8 rows/vreg, 16-bit -> 16, 8-bit -> 32 (sublane packing).
    bits = jnp.dtype(dtype).itemsize * 8
    return max(8, 256 // bits)


def _vmem_capacity_bytes() -> int:
    # Per-TensorCore VMEM budget.  get_tpu_info() may report a per-chip figure
    # on v7x (2 TCs x 64 MiB); clamping to 64 MiB keeps the tile / vmem_limit
    # math per-core-safe on every generation (this kernel never needs more
    # than ~50 MiB of scoped VMEM anyway).
    try:
        reported = int(pltpu.get_tpu_info().vmem_capacity_bytes)
    except Exception:
        reported = 64 * _MIB
    return max(16 * _MIB, min(reported, 64 * _MIB))


def _round_up(n: int, m: int) -> int:
    return -(-n // m) * m


def layer_norm(x, a_2, b_2, eps=1e-6, row_tile=None):
    """LayerNorm over the last axis of x, matching the given PyTorch module."""
    features = x.shape[-1]
    if features < 2:
        # Unbiased std divides by N-1; features == 1 would divide by zero.
        raise ValueError("layer_norm requires features >= 2 (unbiased std).")
    assert a_2.shape == (features,) and b_2.shape == (features,)

    lead_shape = x.shape[:-1]
    rows = math.prod(lead_shape) if lead_shape else 1
    x2d = x.reshape(rows, features)

    # Lane-dense feature axis: pad to a multiple of 128 so loads/stores and the
    # VPU run at full lane utilization.  Production shapes with F % 128 == 0
    # pay nothing for this branch.
    f_pad = _round_up(features, _LANES)
    if f_pad != features:
        x2d = jnp.pad(x2d, ((0, 0), (0, f_pad - features)))
        a2d = jnp.pad(a_2, (0, f_pad - features)).reshape(1, f_pad)
        b2d = jnp.pad(b_2, (0, f_pad - features)).reshape(1, f_pad)
    else:
        a2d = a_2.reshape(1, f_pad)
        b2d = b_2.reshape(1, f_pad)

    itemsize = jnp.dtype(x.dtype).itemsize
    sub = _sublane_multiple(x.dtype)
    capacity = _vmem_capacity_bytes()
    rows_rounded = _round_up(rows, sub)

    # Working-set estimate per row: double-buffered in + out tiles (storage
    # dtype) plus ~5 f32 temporaries (upcast x, diff, squared term, scaled
    # output, slack) for the in-kernel compute.
    per_row_in_bytes = f_pad * itemsize
    per_row_work_bytes = f_pad * (4 * itemsize + 5 * 4)

    # --- Row-tile selection -------------------------------------------------
    if row_tile is None:
        # Bytes-based target: ~8 MiB of input per block amortizes the
        # ~0.35 us per-grid-step overhead to <5% on every generation, clamped
        # so the whole working set fits half the (per-TC) VMEM budget.
        target_bytes = 8 * _MIB
        budget = min(capacity // 2, 32 * _MIB)
        tm = max(sub, (target_bytes // per_row_in_bytes) // sub * sub)
        tm_cap = max(sub, (budget // per_row_work_bytes) // sub * sub)
        tm = min(tm, tm_cap)
    else:
        tm = max(sub, _round_up(int(row_tile), sub))
    tm = min(tm, rows_rounded)

    # Megacore rebalance: at least 4 roughly-even blocks so the "parallel"
    # split gives both v7x TensorCores work (and >= 2 in-flight blocks per
    # core), avoiding a grid of 1-3 blocks with a tiny ragged tail.
    num_blocks = max(4, pl.cdiv(rows, tm))
    tm = min(rows_rounded, max(sub, _round_up(pl.cdiv(rows, num_blocks), sub)))

    # Ragged last block: no wrapper-side row pad / slice needed.  Rows are
    # independent, so stale data in the padded tail never contaminates valid
    # rows, and out-of-bounds writes are dropped.
    grid = (pl.cdiv(rows, tm),)

    # Scoped VMEM: pipelined in/out buffers + f32 compute scratch + params,
    # with headroom, clamped >= 8 MiB below per-TC physical capacity.
    footprint = 2 * tm * f_pad * itemsize          # double-buffered input
    footprint += 2 * tm * f_pad * itemsize         # double-buffered output
    footprint += 5 * tm * f_pad * 4                # f32 compute working set
    footprint += 8 * f_pad * 4                     # (1, F) scale/shift
    vmem_limit = footprint + 16 * _MIB
    vmem_limit = max(32 * _MIB, min(vmem_limit, capacity - 8 * _MIB))

    kernel = functools.partial(_layernorm_kernel, eps=float(eps),
                               n_valid=int(features))

    out2d = pl.pallas_call(
        kernel,
        out_shape=jax.ShapeDtypeStruct((rows, f_pad), x.dtype),
        grid_spec=pltpu.PrefetchScalarGridSpec(
            num_scalar_prefetch=0,
            grid=grid,
            in_specs=[
                pl.BlockSpec((tm, f_pad), lambda i: (i, 0)),
                pl.BlockSpec((1, f_pad), lambda i: (0, 0)),
                pl.BlockSpec((1, f_pad), lambda i: (0, 0)),
            ],
            out_specs=pl.BlockSpec((tm, f_pad), lambda i: (i, 0)),
        ),
        compiler_params=pltpu.CompilerParams(
            dimension_semantics=("parallel",),
            vmem_limit_bytes=int(vmem_limit),
        ),
    )(x2d, a2d, b2d)

    if f_pad != features:
        out2d = out2d[:, :features]
    return out2d.reshape(*lead_shape, features)


def _reference_layer_norm(x, a_2, b_2, eps=1e-6):
    # Pure-JAX reference reproducing the PyTorch forward (unbiased std).
    x = x.astype(jnp.float32)
    mean = jnp.mean(x, axis=-1, keepdims=True)
    var = jnp.sum((x - mean) ** 2, axis=-1, keepdims=True) / (x.shape[-1] - 1)
    std = jnp.sqrt(var)
    return a_2 * (x - mean) / (std + eps) + b_2


if __name__ == "__main__":
    key = jax.random.PRNGKey(0)
    k1, k2 = jax.random.split(key, 2)

    batch, seq, hidden = 2, 8, 32
    x = jax.random.normal(k1, (batch, seq, hidden), dtype=jnp.float32)

    # Deterministic parameter init matching nn.Parameter(torch.ones/zeros(features)).
    a_2 = jnp.ones((hidden,), dtype=jnp.float32)
    b_2 = jnp.zeros((hidden,), dtype=jnp.float32)

    out = jax.block_until_ready(layer_norm(x, a_2, b_2, eps=1e-6))
    ref = _reference_layer_norm(x, a_2, b_2, eps=1e-6)
    assert out.shape == x.shape and out.dtype == x.dtype
    assert jnp.allclose(out, ref, atol=1e-5, rtol=1e-5), "mismatch vs reference"

    # Ragged-row case (rows % tm != 0) to lock in the partial last-block path.
    x2 = jax.random.normal(k2, (3, 5, hidden), dtype=jnp.float32)
    out2 = jax.block_until_ready(layer_norm(x2, a_2, b_2, eps=1e-6))
    ref2 = _reference_layer_norm(x2, a_2, b_2, eps=1e-6)
    assert jnp.allclose(out2, ref2, atol=1e-5, rtol=1e-5), "ragged mismatch"

    print("KERNEL_OK")
</pallas_src>

<mosaic_0001>
module attributes {stable_mosaic.version = 11 : i64} {
  func.func @_layernorm_kernel(%arg0: i32, %arg1: memref<8x128xf32, #tpu.memory_space<vmem>>, %arg2: memref<1x128xf32, #tpu.memory_space<vmem>>, %arg3: memref<1x128xf32, #tpu.memory_space<vmem>>, %arg4: memref<8x128xf32, #tpu.memory_space<vmem>>) attributes {dimension_semantics = [#tpu.dimension_semantics<parallel>], iteration_bounds = array<i64: 2>, scalar_prefetch = 0 : i64, scratch_operands = 0 : i64, tpu.core_type = #tpu.core_type<tc>, window_params = [{transform_indices = @transform_0, window_bounds = array<i64: 8, 128>}, {pipeline_mode = #tpu.pipeline_mode<synchronous>, transform_indices = @transform_1, window_bounds = array<i64: 1, 128>}, {pipeline_mode = #tpu.pipeline_mode<synchronous>, transform_indices = @transform_2, window_bounds = array<i64: 1, 128>}, {transform_indices = @transform_3, window_bounds = array<i64: 8, 128>}]} {
    %c0 = arith.constant 0 : index
    %c0_0 = arith.constant 0 : index
    %0 = vector.load %arg1[%c0, %c0_0] : memref<8x128xf32, #tpu.memory_space<vmem>>, vector<8x128xf32>
    %1 = tpu.iota {dimensions = array<i32: 0>} : vector<128x1xi32>
    %c32_i32 = arith.constant 32 : i32
    %2 = vector.broadcast %c32_i32 : i32 to vector<128x1xi32>
    %3 = arith.cmpi slt, %1, %2 : vector<128x1xi32>
    %4 = arith.extui %3 : vector<128x1xi1> to vector<128x1xi32>
    %5 = arith.sitofp %4 : vector<128x1xi32> to vector<128x1xf32>
    %cst = arith.constant dense<0.000000e+00> : vector<8x1xf32>
    %6 = tpu.matmul %0, %5, %cst {dimension_numbers = #tpu.dot_dimension_numbers<[1], [0], [0], [1], [0, 0, 1, 1], [], []>, precision = #tpu.contract_precision<fp32>} : vector<8x128xf32>, vector<128x1xf32>, vector<8x1xf32> -> vector<8x1xf32>
    %cst_1 = arith.constant 3.125000e-02 : f32
    %7 = vector.broadcast %cst_1 : f32 to vector<8x1xf32>
    %8 = arith.mulf %6, %7 : vector<8x1xf32>
    %9 = vector.broadcast %8 : vector<8x1xf32> to vector<8x128xf32>
    %10 = arith.subf %0, %9 : vector<8x128xf32>
    %11 = arith.mulf %10, %10 : vector<8x128xf32>
    %cst_2 = arith.constant dense<0.000000e+00> : vector<8x1xf32>
    %12 = tpu.matmul %11, %5, %cst_2 {dimension_numbers = #tpu.dot_dimension_numbers<[1], [0], [0], [1], [0, 0, 1, 1], [], []>, precision = #tpu.contract_precision<fp32>} : vector<8x128xf32>, vector<128x1xf32>, vector<8x1xf32> -> vector<8x1xf32>
    %cst_3 = arith.constant 0.0322580636 : f32
    %13 = vector.broadcast %cst_3 : f32 to vector<8x1xf32>
    %14 = arith.mulf %12, %13 : vector<8x1xf32>
    %15 = math.sqrt %14 : vector<8x1xf32>
    %cst_4 = arith.constant 9.99999997E-7 : f32
    %16 = vector.broadcast %cst_4 : f32 to vector<8x1xf32>
    %17 = arith.addf %15, %16 : vector<8x1xf32>
    %18 = tpu.reciprocal %17 : vector<8x1xf32> -> vector<8x1xf32>
    %c0_5 = arith.constant 0 : index
    %c0_6 = arith.constant 0 : index
    %19 = vector.load %arg2[%c0_5, %c0_6] : memref<1x128xf32, #tpu.memory_space<vmem>>, vector<1x128xf32>
    %c0_7 = arith.constant 0 : index
    %c0_8 = arith.constant 0 : index
    %20 = vector.load %arg3[%c0_7, %c0_8] : memref<1x128xf32, #tpu.memory_space<vmem>>, vector<1x128xf32>
    %21 = vector.broadcast %18 : vector<8x1xf32> to vector<8x128xf32>
    %22 = arith.mulf %10, %21 : vector<8x128xf32>
    %23 = vector.broadcast %19 : vector<1x128xf32> to vector<8x128xf32>
    %24 = arith.mulf %23, %22 : vector<8x128xf32>
    %25 = vector.broadcast %20 : vector<1x128xf32> to vector<8x128xf32>
    %26 = arith.addf %24, %25 : vector<8x128xf32>
    %c0_9 = arith.constant 0 : index
    %c0_10 = arith.constant 0 : index
    %27 = vector.load %arg4[%c0_9, %c0_10] : memref<8x128xf32, #tpu.memory_space<vmem>>, vector<8x128xf32>
    tpu.vector_store %arg4[%c0_9, %c0_10], %26 {strides = array<i32>} : memref<8x128xf32, #tpu.memory_space<vmem>>, vector<8x128xf32>,
    return
  }
  func.func @transform_0(%arg0: i32) -> (i32, i32) {
    %c0_i32 = arith.constant 0 : i32
    %c0_i32_0 = arith.constant 0 : i32
    return %arg0, %c0_i32 : i32, i32
  }
  func.func @transform_1(%arg0: i32) -> (i32, i32) {
    %c0_i32 = arith.constant 0 : i32
    %c0_i32_0 = arith.constant 0 : i32
    %c0_i32_1 = arith.constant 0 : i32
    return %c0_i32, %c0_i32_0 : i32, i32
  }
  func.func @transform_2(%arg0: i32) -> (i32, i32) {
    %c0_i32 = arith.constant 0 : i32
    %c0_i32_0 = arith.constant 0 : i32
    %c0_i32_1 = arith.constant 0 : i32
    return %c0_i32, %c0_i32_0 : i32, i32
  }
  func.func @transform_3(%arg0: i32) -> (i32, i32) {
    %c0_i32 = arith.constant 0 : i32
    %c0_i32_0 = arith.constant 0 : i32
    return %arg0, %c0_i32 : i32, i32
  }
}

</mosaic_0001>

<llo_original>
// kernel: tpu_custom_call.1
$region0: #{tpu_custom_call.1}
  #allocation0 [shape = 'u32[]', space=smem, size = 0x4, offset = 0x4, fixed_abs, tag = 'smem constant byte address 0x4 - core index']
  #allocation1 [shape = 'u32[144,128]{1,0:T(1,128)}', space=vmem, size = 0x12000, scoped, tag = 'internal scratch']
  %s0 = inlined_call_operand.hbm [shape: f32[16,128], index: 0, kind: input, shape index: {}]
  %s1 = inlined_call_operand.vmem [shape: f32[1,128], index: 1, kind: input, shape index: {}]
  %s2 = inlined_call_operand.vmem [shape: f32[1,128], index: 2, kind: input, shape index: {}]
  %s3 = inlined_call_operand.hbm [shape: f32[16,128], index: 3, kind: output, shape index: {}]
  %s4 = sld [smem:[#allocation0]]
  $region49: #{tpu_custom_call.1} parent=0
    _
  %s6 = ssub.s32 1, %s4
  %s7 = scalar_select 0, %s6, %s4
  $region1: #{tpu_custom_call.1} parent=0
    #allocation2 [shape = 'u8[8192]{0}', space=vmem, size = 0x2000, scoped, tag = 'input window, operand 0']
    #allocation3 [shape = 's32[2]{0}', space=sflag, size = 0x8, scoped, tag = 'scoped memory for tpu_custom_call.1']
    #allocation4 [shape = 's32[2]{0}', space=sflag, size = 0x8, scoped, tag = 'scoped memory for tpu_custom_call.1']
    #allocation5 [shape = 'u8[8192]{0}', space=vmem, size = 0x2000, scoped, tag = 'output window, operand 0']
    %8 = vsyncpa [#allocation3], 0
    %s9 = scalar_lea.sflag [#allocation3], 1
    %10 = vsyncpa %s9, 0
    %11 = vsyncpa [#allocation4], 0
    %s12 = scalar_lea.sflag [#allocation4], 1
    %13 = vsyncpa %s12, 0
    loop: start=0, step=1, limit=4
    $region2: #{tpu_custom_call.1} parent=1 // loop_pre_header
      _
    $region3: #{tpu_custom_call.1} parent=1 // loop_header
      %s15 = sphi 0, %s19
      %p16 = scmp.ge.s32.totalorder %s15, 4
      %s25 = sphi 0, %s27
      %s28 = sphi 0, %s25
      %s29 = sphi 0, %s28
      %s45 = sphi 0, %s29
      %s49 = sphi 0, %s49
      %s51 = sphi 0, %s49
      %s52 = sphi 0, %s51
      %s66 = sphi 0, %s52
      %s70 = sphi 0, %s70
      %s72 = sphi 0, %s70
      %s73 = sphi 0, %s72
      %s87 = sphi 0, %s73
      %s93 = sphi 0, %s95
      %s96 = sphi 0, %s93
      %s97 = sphi 0, %s96
      %s113 = sphi 0, %s97
    $region4: #{tpu_custom_call.1} parent=1 // loop_header_branch
      %18 = sbr.rel (%p16) target = $region8
    $region5: #{tpu_custom_call.1} parent=1 // loop_body
      %s20 = ssub.s32 %s15, 1
      %s21 = ssub.s32 %s15, 2
      %s22 = sadd.s32 %s15, 1
      %s23 = ssub.s32 %s15, %s22
      %p24 = scmp.eq.s32.totalorder %s23, 0
      %s26 = sadd.s32 %s25, 1
      %s27 = scalar_select %p24, %s25, %s26
      %p30 = pneg %p24
      %p31 = scmp.eq.s32.totalorder %s15, 1
      %p32 = por %p30, %p31
      %p33 = scmp.ne.s32.totalorder %s25, %s28
      %p34 = scmp.eq.s32.totalorder %s15, 0
      %p35 = por %p33, %p34
      %p36 = scmp.ne.s32.totalorder %s25, %s28
      %p37 = scmp.eq.s32.totalorder %s20, 1
      %p38 = por %p36, %p37
      %p39 = scmp.ne.s32.totalorder %s28, %s29
      %p40 = scmp.eq.s32.totalorder %s20, 0
      %p41 = por %p39, %p40
      %p42 = scmp.ne.s32.totalorder %s28, %s29
      %p43 = scmp.eq.s32.totalorder %s21, 1
      %p44 = por %p42, %p43
      %p46 = scmp.ne.s32.totalorder %s29, %s45
      %p47 = scmp.eq.s32.totalorder %s21, 0
      %p48 = por %p46, %p47
      %s50 = sadd.s32 %s49, 1
      %p53 = scmp.eq.s32.totalorder %s15, 1
      %p54 = scmp.ne.s32.totalorder %s49, %s51
      %p55 = scmp.eq.s32.totalorder %s15, 0
      %p56 = por %p54, %p55
      %p57 = scmp.ne.s32.totalorder %s49, %s51
      %p58 = scmp.eq.s32.totalorder %s20, 1
      %p59 = por %p57, %p58
      %p60 = scmp.ne.s32.totalorder %s51, %s52
      %p61 = scmp.eq.s32.totalorder %s20, 0
      %p62 = por %p60, %p61
      %p63 = scmp.ne.s32.totalorder %s51, %s52
      %p64 = scmp.eq.s32.totalorder %s21, 1
      %p65 = por %p63, %p64
      %p67 = scmp.ne.s32.totalorder %s52, %s66
      %p68 = scmp.eq.s32.totalorder %s21, 0
      %p69 = por %p67, %p68
      %s71 = sadd.s32 %s70, 1
      %p74 = scmp.eq.s32.totalorder %s15, 1
      %p75 = scmp.ne.s32.totalorder %s70, %s72
      %p76 = scmp.eq.s32.totalorder %s15, 0
      %p77 = por %p75, %p76
      %p78 = scmp.ne.s32.totalorder %s70, %s72
      %p79 = scmp.eq.s32.totalorder %s20, 1
      %p80 = por %p78, %p79
      %p81 = scmp.ne.s32.totalorder %s72, %s73
      %p82 = scmp.eq.s32.totalorder %s20, 0
      %p83 = por %p81, %p82
      %p84 = scmp.ne.s32.totalorder %s72, %s73
      %p85 = scmp.eq.s32.totalorder %s21, 1
      %p86 = por %p84, %p85
      %p88 = scmp.ne.s32.totalorder %s73, %s87
      %p89 = scmp.eq.s32.totalorder %s21, 0
      %p90 = por %p88, %p89
      %s91 = ssub.s32 %s15, %s22
      %p92 = scmp.eq.s32.totalorder %s91, 0
      %s94 = sadd.s32 %s93, 1
      %s95 = scalar_select %p92, %s93, %s94
      %p98 = pneg %p92
      %p99 = scmp.eq.s32.totalorder %s15, 1
      %p100 = por %p98, %p99
      %p101 = scmp.ne.s32.totalorder %s93, %s96
      %p102 = scmp.eq.s32.totalorder %s15, 0
      %p103 = por %p101, %p102
      %p104 = scmp.ne.s32.totalorder %s93, %s96
      %p105 = scmp.eq.s32.totalorder %s20, 1
      %p106 = por %p104, %p105
      %p107 = scmp.ne.s32.totalorder %s96, %s97
      %p108 = scmp.eq.s32.totalorder %s20, 0
      %p109 = por %p107, %p108
      %p110 = scmp.ne.s32.totalorder %s96, %s97
      %p111 = scmp.eq.s32.totalorder %s21, 1
      %p112 = por %p110, %p111
      %p114 = scmp.ne.s32.totalorder %s97, %s113
      %p115 = scmp.eq.s32.totalorder %s21, 0
      %p116 = por %p114, %p115
      %p117 = scmp.le.s32.totalorder 1, %s15
      %p118 = scmp.lt.s32.totalorder %s15, 3
      %p119 = pnand %p117, %p118
      %p120 = pneg %p119
      // Predicated region
      $region9: #{tpu_custom_call.1} parent=5 // pred_check
        _
      $region10: #{tpu_custom_call.1} parent=5 // pred_check_branch
        %122 = sbr.rel (%p119) target = $region12
      $region11: #{tpu_custom_call.1} parent=5 // pred_region
        %s123 = ssub.s32 %s15, 1
        // Predicated region
        $region13: #{tpu_custom_call.1} parent=11 // pred_check
          %p124 = pneg %p62
        $region14: #{tpu_custom_call.1} parent=11 // pred_check_branch
          %126 = sbr.rel (%p124) target = $region16
        $region15: #{tpu_custom_call.1} parent=11 // pred_region
          _
        $region16: #{tpu_custom_call.1} parent=11 // pred_fallthru
          _
        // Predicated region
        $region17: #{tpu_custom_call.1} parent=11 // pred_check
          %p127 = pneg %p83
        $region18: #{tpu_custom_call.1} parent=11 // pred_check_branch
          %129 = sbr.rel (%p127) target = $region20
        $region19: #{tpu_custom_call.1} parent=11 // pred_region
          _
        $region20: #{tpu_custom_call.1} parent=11 // pred_fallthru
          _
      $region12: #{tpu_custom_call.1} parent=5 // pred_fallthru
        _
      %p130 = scmp.lt.s32.totalorder %s15, 2
      // Predicated region
      $region21: #{tpu_custom_call.1} parent=5 // pred_check
        %p131 = pneg %p130
      $region22: #{tpu_custom_call.1} parent=5 // pred_check_branch
        %133 = sbr.rel (%p131) target = $region24
      $region23: #{tpu_custom_call.1} parent=5 // pred_region
        // Predicated region
        $region25: #{tpu_custom_call.1} parent=23 // pred_check
          %p134 = pneg %p35
        $region26: #{tpu_custom_call.1} parent=23 // pred_check_branch
          %136 = sbr.rel (%p134) target = $region28
        $region27: #{tpu_custom_call.1} parent=23 // pred_region
          %s137 = sand.u32 %s25, 1
          %s138 = scalar_lea.sflag [#allocation3], %s137
          %s139 = sand.u32 %s25, 1
          %s140 = smul.addr %s139, 8
          %s141 = scalar_lea.vmem [#allocation2], %s140
          %s143 = ssub.s32 128, 128
          %144 = vsyncadd %s138, %s143
          %s145 = smul.addr %s15, 128
          %s146 = scalar_lea.hbm %s0, %s145
          %s148 = sshll.u32 %s141, 4
          %s149 = int_to_ptr.vmem [resolvable:$true] %s148
          %151 = dma.hbm_to_vmem [thread:$0]  %s146, 128, %s149, %s138
        $region28: #{tpu_custom_call.1} parent=23 // pred_fallthru
          _
      $region24: #{tpu_custom_call.1} parent=5 // pred_fallthru
        _
      %p152 = scmp.le.s32.totalorder 1, %s15
      %p153 = scmp.lt.s32.totalorder %s15, 3
      %p154 = pnand %p152, %p153
      %p155 = pneg %p154
      // Predicated region
      $region29: #{tpu_custom_call.1} parent=5 // pred_check
        _
      $region30: #{tpu_custom_call.1} parent=5 // pred_check_branch
        %157 = sbr.rel (%p154) target = $region32
      $region31: #{tpu_custom_call.1} parent=5 // pred_region
        %s158 = ssub.s32 %s15, 1
        %s159 = sand.u32 %s28, 1
        %s160 = scalar_lea.sflag [#allocation3], %s159
        %s161 = sand.u32 %s28, 1
        %s162 = smul.addr %s161, 8
        %s163 = scalar_lea.vmem [#allocation2], %s162
        // Predicated region
        $region33: #{tpu_custom_call.1} parent=31 // pred_check
          %p164 = pneg %p41
        $region34: #{tpu_custom_call.1} parent=31 // pred_check_branch
          %166 = sbr.rel (%p164) target = $region36
        $region35: #{tpu_custom_call.1} parent=31 // pred_region
          %167 = dma.done %s160, 128
        $region36: #{tpu_custom_call.1} parent=31 // pred_fallthru
          _
        %s168 = sand.u32 %s28, 1
        %s169 = scalar_lea.sflag [#allocation3], %s168
        %s170 = sand.u32 %s28, 1
        %s171 = smul.addr %s170, 8
        %s172 = scalar_lea.vmem [#allocation2], %s171
        %p173 = pneg %p41
        %p174 = pneg %p38
        %p175 = pneg %p62
        %p176 = pneg %p59
        %p177 = pneg %p83
        %p178 = pneg %p80
        %p179 = pneg %p109
        %p180 = pneg %p106
        %s181 = sand.u32 %s96, 1
        %s182 = scalar_lea.sflag [#allocation4], %s181
        %s183 = sand.u32 %s96, 1
        %s184 = smul.addr %s183, 8
        %s185 = scalar_lea.vmem [#allocation5], %s184
        %v186 = vld [vmem:[%s163] sm:$0xff]
        %v187 = vlaneseq
        %v188 = vshrl.u32 %v187, 7
        %v189 = vadd.s32 %v188, 8
        %v190 = vadd.s32 %v188, 16
        %v191 = vadd.s32 %v188, 24
        %v192 = vadd.s32 %v188, 32
        %v193 = vadd.s32 %v188, 40
        %v194 = vadd.s32 %v188, 48
        %v195 = vadd.s32 %v188, 56
        %v196 = vadd.s32 %v188, 64
        %v197 = vadd.s32 %v188, 72
        %v198 = vadd.s32 %v188, 80
        %v199 = vadd.s32 %v188, 88
        %v200 = vadd.s32 %v188, 96
        %v201 = vadd.s32 %v188, 104
        %v202 = vadd.s32 %v188, 112
        %v203 = vadd.s32 %v188, 120
        %vm204 = vcmp.lt.s32.totalorder %v188, 32
        %vm205 = vcmp.lt.s32.totalorder %v189, 32
        %vm206 = vcmp.lt.s32.totalorder %v190, 32
        %vm207 = vcmp.lt.s32.totalorder %v191, 32
        %vm208 = vcmp.lt.s32.totalorder %v192, 32
        %vm209 = vcmp.lt.s32.totalorder %v193, 32
        %vm210 = vcmp.lt.s32.totalorder %v194, 32
        %vm211 = vcmp.lt.s32.totalorder %v195, 32
        %vm212 = vcmp.lt.s32.totalorder %v196, 32
        %vm213 = vcmp.lt.s32.totalorder %v197, 32
        %vm214 = vcmp.lt.s32.totalorder %v198, 32
        %vm215 = vcmp.lt.s32.totalorder %v199, 32
        %vm216 = vcmp.lt.s32.totalorder %v200, 32
        %vm217 = vcmp.lt.s32.totalorder %v201, 32
        %vm218 = vcmp.lt.s32.totalorder %v202, 32
        %vm219 = vcmp.lt.s32.totalorder %v203, 32
        %v220 = vsel %vm204, 1, 0
        %v221 = vsel %vm205, 1, 0
        %v222 = vsel %vm206, 1, 0
        %v223 = vsel %vm207, 1, 0
        %v224 = vsel %vm208, 1, 0
        %v225 = vsel %vm209, 1, 0
        %v226 = vsel %vm210, 1, 0
        %v227 = vsel %vm211, 1, 0
        %v228 = vsel %vm212, 1, 0
        %v229 = vsel %vm213, 1, 0
        %v230 = vsel %vm214, 1, 0
        %v231 = vsel %vm215, 1, 0
        %v232 = vsel %vm216, 1, 0
        %v233 = vsel %vm217, 1, 0
        %v234 = vsel %vm218, 1, 0
        %v235 = vsel %vm219, 1, 0
        %v236 = vcvt.s32.f32 %v220
        %v237 = vcvt.s32.f32 %v221
        %v238 = vcvt.s32.f32 %v222
        %v239 = vcvt.s32.f32 %v223
        %v240 = vcvt.s32.f32 %v224
        %v241 = vcvt.s32.f32 %v225
        %v242 = vcvt.s32.f32 %v226
        %v243 = vcvt.s32.f32 %v227
        %v244 = vcvt.s32.f32 %v228
        %v245 = vcvt.s32.f32 %v229
        %v246 = vcvt.s32.f32 %v230
        %v247 = vcvt.s32.f32 %v231
        %v248 = vcvt.s32.f32 %v232
        %v249 = vcvt.s32.f32 %v233
        %v250 = vcvt.s32.f32 %v234
        %v251 = vcvt.s32.f32 %v235
        %252 = vmatprep.subr.mxu0 0.0
        %v253 = vand.u32 %v236, 4294901760
        %254 = vmatpush1.msra.mxu0 %v253
        %255 = vmatprep.subr.mxu0 0.0
        %v256 = vand.u32 %v237, 4294901760
        %257 = vmatpush1.msra.mxu0 %v256
        %258 = vmatprep.subr.mxu0 0.0
        %v259 = vand.u32 %v238, 4294901760
        %260 = vmatpush1.msra.mxu0 %v259
        %261 = vmatprep.subr.mxu0 0.0
        %v262 = vand.u32 %v239, 4294901760
        %263 = vmatpush1.msra.mxu0 %v262
        %264 = vmatprep.subr.mxu0 0.0
        %v265 = vand.u32 %v240, 4294901760
        %266 = vmatpush1.msra.mxu0 %v265
        %267 = vmatprep.subr.mxu0 0.0
        %v268 = vand.u32 %v241, 4294901760
        %269 = vmatpush1.msra.mxu0 %v268
        %270 = vmatprep.subr.mxu0 0.0
        %v271 = vand.u32 %v242, 4294901760
        %272 = vmatpush1.msra.mxu0 %v271
        %273 = vmatprep.subr.mxu0 0.0
        %v274 = vand.u32 %v243, 4294901760
        %275 = vmatpush1.msra.mxu0 %v274
        %276 = vmatprep.subr.mxu0 0.0
        %v277 = vand.u32 %v244, 4294901760
        %278 = vmatpush1.msra.mxu0 %v277
        %279 = vmatprep.subr.mxu0 0.0
        %v280 = vand.u32 %v245, 4294901760
        %281 = vmatpush1.msra.mxu0 %v280
        %282 = vmatprep.subr.mxu0 0.0
        %v283 = vand.u32 %v246, 4294901760
        %284 = vmatpush1.msra.mxu0 %v283
        %285 = vmatprep.subr.mxu0 0.0
        %v286 = vand.u32 %v247, 4294901760
        %287 = vmatpush1.msra.mxu0 %v286
        %288 = vmatprep.subr.mxu0 0.0
        %v289 = vand.u32 %v248, 4294901760
        %290 = vmatpush1.msra.mxu0 %v289
        %291 = vmatprep.subr.mxu0 0.0
        %v292 = vand.u32 %v249, 4294901760
        %293 = vmatpush1.msra.mxu0 %v292
        %294 = vmatprep.subr.mxu0 0.0
        %v295 = vand.u32 %v250, 4294901760
        %296 = vmatpush1.msra.mxu0 %v295
        %297 = vmatprep.subr.mxu0 0.0
        %v298 = vand.u32 %v251, 4294901760
        %299 = vmatpush1.msra.mxu0 %v298
        %300 = vmatprep.subr.mxu0 0.0
        %301 = vmatpush1.msra.mxu0 0.0
        %302 = vmatprep.subr.mxu0 0.0
        %303 = vmatpush1.msra.mxu0 0.0
        %304 = vmatprep.subr.mxu0 0.0
        %305 = vmatpush1.msra.mxu0 0.0
        %306 = vmatprep.subr.mxu0 0.0
        %307 = vmatpush1.msra.mxu0 0.0
        %308 = vmatprep.subr.mxu0 0.0
        %309 = vmatpush1.msra.mxu0 0.0
        %310 = vmatprep.subr.mxu0 0.0
        %311 = vmatpush1.msra.mxu0 0.0
        %312 = vmatprep.subr.mxu0 0.0
        %313 = vmatpush1.msra.mxu0 0.0
        %314 = vmatprep.subr.mxu0 0.0
        %315 = vmatpush1.msra.mxu0 0.0
        %316 = vmatprep.subr.mxu0 0.0
        %317 = vmatpush1.msra.mxu0 0.0
        %318 = vmatprep.subr.mxu0 0.0
        %319 = vmatpush1.msra.mxu0 0.0
        %320 = vmatprep.subr.mxu0 0.0
        %321 = vmatpush1.msra.mxu0 0.0
        %322 = vmatprep.subr.mxu0 0.0
        %323 = vmatpush1.msra.mxu0 0.0
        %324 = vmatprep.subr.mxu0 0.0
        %325 = vmatpush1.msra.mxu0 0.0
        %326 = vmatprep.subr.mxu0 0.0
        %327 = vmatpush1.msra.mxu0 0.0
        %328 = vmatprep.subr.mxu0 0.0
        %329 = vmatpush1.msra.mxu0 0.0
        %330 = vmatprep.subr.mxu0 0.0
        %331 = vmatpush1.msra.mxu0 0.0
        %332 = vmatprep.mubr.f32.mxu0 0.0
        %v333 = vand.u32 %v186, 4294901760
        %v334 = vsub.f32 %v186, %v333
        %v335 = vand.u32 %v334, 4294901760
        %v336 = vsub.f32 %v334, %v335
        %v337 = vand.u32 %v336, 4294901760
        %338 = vmatmul.mubr.f32.gmra.mrb[0].mxu0 %v337
        %v339 = vpop.f32.mrb[0].mxu0
        %v340 = vadd.f32 0.0, %v339
        %v341 = vpop.f32.mrb[0].mxu0
        %342 = vdwg.mxu0
        %343 = vmatprep.subr.mxu0 0.0
        %v344 = vand.u32 %v236, 4294901760
        %v345 = vsub.f32 %v236, %v344
        %v346 = vand.u32 %v345, 4294901760
        %v347 = vsub.f32 %v345, %v346
        %v348 = vand.u32 %v347, 4294901760
        %349 = vmatpush1.msra.mxu0 %v348
        %350 = vmatprep.subr.mxu0 0.0
        %v351 = vand.u32 %v237, 4294901760
        %v352 = vsub.f32 %v237, %v351
        %v353 = vand.u32 %v352, 4294901760
        %v354 = vsub.f32 %v352, %v353
        %v355 = vand.u32 %v354, 4294901760
        %356 = vmatpush1.msra.mxu0 %v355
        %357 = vmatprep.subr.mxu0 0.0
        %v358 = vand.u32 %v238, 4294901760
        %v359 = vsub.f32 %v238, %v358
        %v360 = vand.u32 %v359, 4294901760
        %v361 = vsub.f32 %v359, %v360
        %v362 = vand.u32 %v361, 4294901760
        %363 = vmatpush1.msra.mxu0 %v362
        %364 = vmatprep.subr.mxu0 0.0
        %v365 = vand.u32 %v239, 4294901760
        %v366 = vsub.f32 %v239, %v365
        %v367 = vand.u32 %v366, 4294901760
        %v368 = vsub.f32 %v366, %v367
        %v369 = vand.u32 %v368, 4294901760
        %370 = vmatpush1.msra.mxu0 %v369
        %371 = vmatprep.subr.mxu0 0.0
        %v372 = vand.u32 %v240, 4294901760
        %v373 = vsub.f32 %v240, %v372
        %v374 = vand.u32 %v373, 4294901760
        %v375 = vsub.f32 %v373, %v374
        %v376 = vand.u32 %v375, 4294901760
        %377 = vmatpush1.msra.mxu0 %v376
        %378 = vmatprep.subr.mxu0 0.0
        %v379 = vand.u32 %v241, 4294901760
        %v380 = vsub.f32 %v241, %v379
        %v381 = vand.u32 %v380, 4294901760
        %v382 = vsub.f32 %v380, %v381
        %v383 = vand.u32 %v382, 4294901760
        %384 = vmatpush1.msra.mxu0 %v383
        %385 = vmatprep.subr.mxu0 0.0
        %v386 = vand.u32 %v242, 4294901760
        %v387 = vsub.f32 %v242, %v386
        %v388 = vand.u32 %v387, 4294901760
        %v389 = vsub.f32 %v387, %v388
        %v390 = vand.u32 %v389, 4294901760
        %391 = vmatpush1.msra.mxu0 %v390
        %392 = vmatprep.subr.mxu0 0.0
        %v393 = vand.u32 %v243, 4294901760
        %v394 = vsub.f32 %v243, %v393
        %v395 = vand.u32 %v394, 4294901760
        %v396 = vsub.f32 %v394, %v395
        %v397 = vand.u32 %v396, 4294901760
        %398 = vmatpush1.msra.mxu0 %v397
        %399 = vmatprep.subr.mxu0 0.0
        %v400 = vand.u32 %v244, 4294901760
        %v401 = vsub.f32 %v244, %v400
        %v402 = vand.u32 %v401, 4294901760
        %v403 = vsub.f32 %v401, %v402
        %v404 = vand.u32 %v403, 4294901760
        %405 = vmatpush1.msra.mxu0 %v404
        %406 = vmatprep.subr.mxu0 0.0
        %v407 = vand.u32 %v245, 4294901760
        %v408 = vsub.f32 %v245, %v407
        %v409 = vand.u32 %v408, 4294901760
        %v410 = vsub.f32 %v408, %v409
        %v411 = vand.u32 %v410, 4294901760
        %412 = vmatpush1.msra.mxu0 %v411
        %413 = vmatprep.subr.mxu0 0.0
        %v414 = vand.u32 %v246, 4294901760
        %v415 = vsub.f32 %v246, %v414
        %v416 = vand.u32 %v415, 4294901760
        %v417 = vsub.f32 %v415, %v416
        %v418 = vand.u32 %v417, 4294901760
        %419 = vmatpush1.msra.mxu0 %v418
        %420 = vmatprep.subr.mxu0 0.0
        %v421 = vand.u32 %v247, 4294901760
        %v422 = vsub.f32 %v247, %v421
        %v423 = vand.u32 %v422, 4294901760
        %v424 = vsub.f32 %v422, %v423
        %v425 = vand.u32 %v424, 4294901760
        %426 = vmatpush1.msra.mxu0 %v425
        %427 = vmatprep.subr.mxu0 0.0
        %v428 = vand.u32 %v248, 4294901760
        %v429 = vsub.f32 %v248, %v428
        %v430 = vand.u32 %v429, 4294901760
        %v431 = vsub.f32 %v429, %v430
        %v432 = vand.u32 %v431, 4294901760
        %433 = vmatpush1.msra.mxu0 %v432
        %434 = vmatprep.subr.mxu0 0.0
        %v435 = vand.u32 %v249, 4294901760
        %v436 = vsub.f32 %v249, %v435
        %v437 = vand.u32 %v436, 4294901760
        %v438 = vsub.f32 %v436, %v437
        %v439 = vand.u32 %v438, 4294901760
        %440 = vmatpush1.msra.mxu0 %v439
        %441 = vmatprep.subr.mxu0 0.0
        %v442 = vand.u32 %v250, 4294901760
        %v443 = vsub.f32 %v250, %v442
        %v444 = vand.u32 %v443, 4294901760
        %v445 = vsub.f32 %v443, %v444
        %v446 = vand.u32 %v445, 4294901760
        %447 = vmatpush1.msra.mxu0 %v446
        %448 = vmatprep.subr.mxu0 0.0
        %v449 = vand.u32 %v251, 4294901760
        %v450 = vsub.f32 %v251, %v449
        %v451 = vand.u32 %v450, 4294901760
        %v452 = vsub.f32 %v450, %v451
        %v453 = vand.u32 %v452, 4294901760
        %454 = vmatpush1.msra.mxu0 %v453
        %455 = vmatprep.subr.mxu0 0.0
        %456 = vmatpush1.msra.mxu0 0.0
        %457 = vmatprep.subr.mxu0 0.0
        %458 = vmatpush1.msra.mxu0 0.0
        %459 = vmatprep.subr.mxu0 0.0
        %460 = vmatpush1.msra.mxu0 0.0
        %461 = vmatprep.subr.mxu0 0.0
        %462 = vmatpush1.msra.mxu0 0.0
        %463 = vmatprep.subr.mxu0 0.0
        %464 = vmatpush1.msra.mxu0 0.0
        %465 = vmatprep.subr.mxu0 0.0
        %466 = vmatpush1.msra.mxu0 0.0
        %467 = vmatprep.subr.mxu0 0.0
        %468 = vmatpush1.msra.mxu0 0.0
        %469 = vmatprep.subr.mxu0 0.0
        %470 = vmatpush1.msra.mxu0 0.0
        %471 = vmatprep.subr.mxu0 0.0
        %472 = vmatpush1.msra.mxu0 0.0
        %473 = vmatprep.subr.mxu0 0.0
        %474 = vmatpush1.msra.mxu0 0.0
        %475 = vmatprep.subr.mxu0 0.0
        %476 = vmatpush1.msra.mxu0 0.0
        %477 = vmatprep.subr.mxu0 0.0
        %478 = vmatpush1.msra.mxu0 0.0
        %479 = vmatprep.subr.mxu0 0.0
        %480 = vmatpush1.msra.mxu0 0.0
        %481 = vmatprep.subr.mxu0 0.0
        %482 = vmatpush1.msra.mxu0 0.0
        %483 = vmatprep.subr.mxu0 0.0
        %484 = vmatpush1.msra.mxu0 0.0
        %485 = vmatprep.subr.mxu0 0.0
        %486 = vmatpush1.msra.mxu0 0.0
        %487 = vmatprep.mubr.f32.mxu0 0.0
        %v488 = vand.u32 %v186, 4294901760
        %489 = vmatmul.mubr.f32.gmra.mrb[0].mxu0 %v488
        %v490 = vpop.f32.mrb[0].mxu0
        %v491 = vadd.f32 %v340, %v490
        %v492 = vpop.f32.mrb[0].mxu0
        %493 = vdwg.mxu0
        %494 = vmatprep.subr.mxu0 0.0
        %v495 = vand.u32 %v236, 4294901760
        %v496 = vsub.f32 %v236, %v495
        %497 = vmatpush1.msra.mxu0 %v496
        %498 = vmatprep.subr.mxu0 0.0
        %v499 = vand.u32 %v237, 4294901760
        %v500 = vsub.f32 %v237, %v499
        %501 = vmatpush1.msra.mxu0 %v500
        %502 = vmatprep.subr.mxu0 0.0
        %v503 = vand.u32 %v238, 4294901760
        %v504 = vsub.f32 %v238, %v503
        %505 = vmatpush1.msra.mxu0 %v504
        %506 = vmatprep.subr.mxu0 0.0
        %v507 = vand.u32 %v239, 4294901760
        %v508 = vsub.f32 %v239, %v507
        %509 = vmatpush1.msra.mxu0 %v508
        %510 = vmatprep.subr.mxu0 0.0
        %v511 = vand.u32 %v240, 4294901760
        %v512 = vsub.f32 %v240, %v511
        %513 = vmatpush1.msra.mxu0 %v512
        %514 = vmatprep.subr.mxu0 0.0
        %v515 = vand.u32 %v241, 4294901760
        %v516 = vsub.f32 %v241, %v515
        %517 = vmatpush1.msra.mxu0 %v516
        %518 = vmatprep.subr.mxu0 0.0
        %v519 = vand.u32 %v242, 4294901760
        %v520 = vsub.f32 %v242, %v519
        %521 = vmatpush1.msra.mxu0 %v520
        %522 = vmatprep.subr.mxu0 0.0
        %v523 = vand.u32 %v243, 4294901760
        %v524 = vsub.f32 %v243, %v523
        %525 = vmatpush1.msra.mxu0 %v524
        %526 = vmatprep.subr.mxu0 0.0
        %v527 = vand.u32 %v244, 4294901760
        %v528 = vsub.f32 %v244, %v527
        %529 = vmatpush1.msra.mxu0 %v528
        %530 = vmatprep.subr.mxu0 0.0
        %v531 = vand.u32 %v245, 4294901760
        %v532 = vsub.f32 %v245, %v531
        %533 = vmatpush1.msra.mxu0 %v532
        %534 = vmatprep.subr.mxu0 0.0
        %v535 = vand.u32 %v246, 4294901760
        %v536 = vsub.f32 %v246, %v535
        %537 = vmatpush1.msra.mxu0 %v536
        %538 = vmatprep.subr.mxu0 0.0
        %v539 = vand.u32 %v247, 4294901760
        %v540 = vsub.f32 %v247, %v539
        %541 = vmatpush1.msra.mxu0 %v540
        %542 = vmatprep.subr.mxu0 0.0
        %v543 = vand.u32 %v248, 4294901760
        %v544 = vsub.f32 %v248, %v543
        %545 = vmatpush1.msra.mxu0 %v544
        %546 = vmatprep.subr.mxu0 0.0
        %v547 = vand.u32 %v249, 4294901760
        %v548 = vsub.f32 %v249, %v547
        %549 = vmatpush1.msra.mxu0 %v548
        %550 = vmatprep.subr.mxu0 0.0
        %v551 = vand.u32 %v250, 4294901760
        %v552 = vsub.f32 %v250, %v551
        %553 = vmatpush1.msra.mxu0 %v552
        %554 = vmatprep.subr.mxu0 0.0
        %v555 = vand.u32 %v251, 4294901760
        %v556 = vsub.f32 %v251, %v555
        %557 = vmatpush1.msra.mxu0 %v556
        %558 = vmatprep.subr.mxu0 0.0
        %559 = vmatpush1.msra.mxu0 0.0
        %560 = vmatprep.subr.mxu0 0.0
        %561 = vmatpush1.msra.mxu0 0.0
        %562 = vmatprep.subr.mxu0 0.0
        %563 = vmatpush1.msra.mxu0 0.0
        %564 = vmatprep.subr.mxu0 0.0
        %565 = vmatpush1.msra.mxu0 0.0
        %566 = vmatprep.subr.mxu0 0.0
        %567 = vmatpush1.msra.mxu0 0.0
        %568 = vmatprep.subr.mxu0 0.0
        %569 = vmatpush1.msra.mxu0 0.0
        %570 = vmatprep.subr.mxu0 0.0
        %571 = vmatpush1.msra.mxu0 0.0
        %572 = vmatprep.subr.mxu0 0.0
        %573 = vmatpush1.msra.mxu0 0.0
        %574 = vmatprep.subr.mxu0 0.0
        %575 = vmatpush1.msra.mxu0 0.0
        %576 = vmatprep.subr.mxu0 0.0
        %577 = vmatpush1.msra.mxu0 0.0
        %578 = vmatprep.subr.mxu0 0.0
        %579 = vmatpush1.msra.mxu0 0.0
        %580 = vmatprep.subr.mxu0 0.0
        %581 = vmatpush1.msra.mxu0 0.0
        %582 = vmatprep.subr.mxu0 0.0
        %583 = vmatpush1.msra.mxu0 0.0
        %584 = vmatprep.subr.mxu0 0.0
        %585 = vmatpush1.msra.mxu0 0.0
        %586 = vmatprep.subr.mxu0 0.0
        %587 = vmatpush1.msra.mxu0 0.0
        %588 = vmatprep.subr.mxu0 0.0
        %589 = vmatpush1.msra.mxu0 0.0
        %590 = vmatprep.mubr.f32.mxu0 0.0
        %v591 = vand.u32 %v186, 4294901760
        %v592 = vsub.f32 %v186, %v591
        %593 = vmatmul.mubr.f32.gmra.mrb[0].mxu0 %v592
        %v594 = vpop.f32.mrb[0].mxu0
        %v595 = vadd.f32 %v491, %v594
        %v596 = vpop.f32.mrb[0].mxu0
        %597 = vdwg.mxu0
        %598 = vmatprep.subr.mxu0 0.0
        %v599 = vand.u32 %v236, 4294901760
        %600 = vmatpush1.msra.mxu0 %v599
        %601 = vmatprep.subr.mxu0 0.0
        %v602 = vand.u32 %v237, 4294901760
        %603 = vmatpush1.msra.mxu0 %v602
        %604 = vmatprep.subr.mxu0 0.0
        %v605 = vand.u32 %v238, 4294901760
        %606 = vmatpush1.msra.mxu0 %v605
        %607 = vmatprep.subr.mxu0 0.0
        %v608 = vand.u32 %v239, 4294901760
        %609 = vmatpush1.msra.mxu0 %v608
        %610 = vmatprep.subr.mxu0 0.0
        %v611 = vand.u32 %v240, 4294901760
        %612 = vmatpush1.msra.mxu0 %v611
        %613 = vmatprep.subr.mxu0 0.0
        %v614 = vand.u32 %v241, 4294901760
        %615 = vmatpush1.msra.mxu0 %v614
        %616 = vmatprep.subr.mxu0 0.0
        %v617 = vand.u32 %v242, 4294901760
        %618 = vmatpush1.msra.mxu0 %v617
        %619 = vmatprep.subr.mxu0 0.0
        %v620 = vand.u32 %v243, 4294901760
        %621 = vmatpush1.msra.mxu0 %v620
        %622 = vmatprep.subr.mxu0 0.0
        %v623 = vand.u32 %v244, 4294901760
        %624 = vmatpush1.msra.mxu0 %v623
        %625 = vmatprep.subr.mxu0 0.0
        %v626 = vand.u32 %v245, 4294901760
        %627 = vmatpush1.msra.mxu0 %v626
        %628 = vmatprep.subr.mxu0 0.0
        %v629 = vand.u32 %v246, 4294901760
        %630 = vmatpush1.msra.mxu0 %v629
        %631 = vmatprep.subr.mxu0 0.0
        %v632 = vand.u32 %v247, 4294901760
        %633 = vmatpush1.msra.mxu0 %v632
        %634 = vmatprep.subr.mxu0 0.0
        %v635 = vand.u32 %v248, 4294901760
        %636 = vmatpush1.msra.mxu0 %v635
        %637 = vmatprep.subr.mxu0 0.0
        %v638 = vand.u32 %v249, 4294901760
        %639 = vmatpush1.msra.mxu0 %v638
        %640 = vmatprep.subr.mxu0 0.0
        %v641 = vand.u32 %v250, 4294901760
        %642 = vmatpush1.msra.mxu0 %v641
        %643 = vmatprep.subr.mxu0 0.0
        %v644 = vand.u32 %v251, 4294901760
        %645 = vmatpush1.msra.mxu0 %v644
        %646 = vmatprep.subr.mxu0 0.0
        %647 = vmatpush1.msra.mxu0 0.0
        %648 = vmatprep.subr.mxu0 0.0
        %649 = vmatpush1.msra.mxu0 0.0
        %650 = vmatprep.subr.mxu0 0.0
        %651 = vmatpush1.msra.mxu0 0.0
        %652 = vmatprep.subr.mxu0 0.0
        %653 = vmatpush1.msra.mxu0 0.0
        %654 = vmatprep.subr.mxu0 0.0
        %655 = vmatpush1.msra.mxu0 0.0
        %656 = vmatprep.subr.mxu0 0.0
        %657 = vmatpush1.msra.mxu0 0.0
        %658 = vmatprep.subr.mxu0 0.0
        %659 = vmatpush1.msra.mxu0 0.0
        %660 = vmatprep.subr.mxu0 0.0
        %661 = vmatpush1.msra.mxu0 0.0
        %662 = vmatprep.subr.mxu0 0.0
        %663 = vmatpush1.msra.mxu0 0.0
        %664 = vmatprep.subr.mxu0 0.0
        %665 = vmatpush1.msra.mxu0 0.0
        %666 = vmatprep.subr.mxu0 0.0
        %667 = vmatpush1.msra.mxu0 0.0
        %668 = vmatprep.subr.mxu0 0.0
        %669 = vmatpush1.msra.mxu0 0.0
        %670 = vmatprep.subr.mxu0 0.0
        %671 = vmatpush1.msra.mxu0 0.0
        %672 = vmatprep.subr.mxu0 0.0
        %673 = vmatpush1.msra.mxu0 0.0
        %674 = vmatprep.subr.mxu0 0.0
        %675 = vmatpush1.msra.mxu0 0.0
        %676 = vmatprep.subr.mxu0 0.0
        %677 = vmatpush1.msra.mxu0 0.0
        %678 = vmatprep.mubr.f32.mxu0 0.0
        %v679 = vand.u32 %v186, 4294901760
        %v680 = vsub.f32 %v186, %v679
        %v681 = vand.u32 %v680, 4294901760
        %682 = vmatmul.mubr.f32.gmra.mrb[0].mxu0 %v681
        %v683 = vpop.f32.mrb[0].mxu0
        %v684 = vadd.f32 %v595, %v683
        %v685 = vpop.f32.mrb[0].mxu0
        %686 = vdwg.mxu0
        %687 = vmatprep.subr.mxu0 0.0
        %v688 = vand.u32 %v236, 4294901760
        %v689 = vsub.f32 %v236, %v688
        %v690 = vand.u32 %v689, 4294901760
        %691 = vmatpush1.msra.mxu0 %v690
        %692 = vmatprep.subr.mxu0 0.0
        %v693 = vand.u32 %v237, 4294901760
        %v694 = vsub.f32 %v237, %v693
        %v695 = vand.u32 %v694, 4294901760
        %696 = vmatpush1.msra.mxu0 %v695
        %697 = vmatprep.subr.mxu0 0.0
        %v698 = vand.u32 %v238, 4294901760
        %v699 = vsub.f32 %v238, %v698
        %v700 = vand.u32 %v699, 4294901760
        %701 = vmatpush1.msra.mxu0 %v700
        %702 = vmatprep.subr.mxu0 0.0
        %v703 = vand.u32 %v239, 4294901760
        %v704 = vsub.f32 %v239, %v703
        %v705 = vand.u32 %v704, 4294901760
        %706 = vmatpush1.msra.mxu0 %v705
        %707 = vmatprep.subr.mxu0 0.0
        %v708 = vand.u32 %v240, 4294901760
        %v709 = vsub.f32 %v240, %v708
        %v710 = vand.u32 %v709, 4294901760
        %711 = vmatpush1.msra.mxu0 %v710
        %712 = vmatprep.subr.mxu0 0.0
        %v713 = vand.u32 %v241, 4294901760
        %v714 = vsub.f32 %v241, %v713
        %v715 = vand.u32 %v714, 4294901760
        %716 = vmatpush1.msra.mxu0 %v715
        %717 = vmatprep.subr.mxu0 0.0
        %v718 = vand.u32 %v242, 4294901760
        %v719 = vsub.f32 %v242, %v718
        %v720 = vand.u32 %v719, 4294901760
        %721 = vmatpush1.msra.mxu0 %v720
        %722 = vmatprep.subr.mxu0 0.0
        %v723 = vand.u32 %v243, 4294901760
        %v724 = vsub.f32 %v243, %v723
        %v725 = vand.u32 %v724, 4294901760
        %726 = vmatpush1.msra.mxu0 %v725
        %727 = vmatprep.subr.mxu0 0.0
        %v728 = vand.u32 %v244, 4294901760
        %v729 = vsub.f32 %v244, %v728
        %v730 = vand.u32 %v729, 4294901760
        %731 = vmatpush1.msra.mxu0 %v730
        %732 = vmatprep.subr.mxu0 0.0
        %v733 = vand.u32 %v245, 4294901760
        %v734 = vsub.f32 %v245, %v733
        %v735 = vand.u32 %v734, 4294901760
        %736 = vmatpush1.msra.mxu0 %v735
        %737 = vmatprep.subr.mxu0 0.0
        %v738 = vand.u32 %v246, 4294901760
        %v739 = vsub.f32 %v246, %v738
        %v740 = vand.u32 %v739, 4294901760
        %741 = vmatpush1.msra.mxu0 %v740
        %742 = vmatprep.subr.mxu0 0.0
        %v743 = vand.u32 %v247, 4294901760
        %v744 = vsub.f32 %v247, %v743
        %v745 = vand.u32 %v744, 4294901760
        %746 = vmatpush1.msra.mxu0 %v745
        %747 = vmatprep.subr.mxu0 0.0
        %v748 = vand.u32 %v248, 4294901760
        %v749 = vsub.f32 %v248, %v748
        %v750 = vand.u32 %v749, 4294901760
        %751 = vmatpush1.msra.mxu0 %v750
        %752 = vmatprep.subr.mxu0 0.0
        %v753 = vand.u32 %v249, 4294901760
        %v754 = vsub.f32 %v249, %v753
        %v755 = vand.u32 %v754, 4294901760
        %756 = vmatpush1.msra.mxu0 %v755
        %757 = vmatprep.subr.mxu0 0.0
        %v758 = vand.u32 %v250, 4294901760
        %v759 = vsub.f32 %v250, %v758
        %v760 = vand.u32 %v759, 4294901760
        %761 = vmatpush1.msra.mxu0 %v760
        %762 = vmatprep.subr.mxu0 0.0
        %v763 = vand.u32 %v251, 4294901760
        %v764 = vsub.f32 %v251, %v763
        %v765 = vand.u32 %v764, 4294901760
        %766 = vmatpush1.msra.mxu0 %v765
        %767 = vmatprep.subr.mxu0 0.0
        %768 = vmatpush1.msra.mxu0 0.0
        %769 = vmatprep.subr.mxu0 0.0
        %770 = vmatpush1.msra.mxu0 0.0
        %771 = vmatprep.subr.mxu0 0.0
        %772 = vmatpush1.msra.mxu0 0.0
        %773 = vmatprep.subr.mxu0 0.0
        %774 = vmatpush1.msra.mxu0 0.0
        %775 = vmatprep.subr.mxu0 0.0
        %776 = vmatpush1.msra.mxu0 0.0
        %777 = vmatprep.subr.mxu0 0.0
        %778 = vmatpush1.msra.mxu0 0.0
        %779 = vmatprep.subr.mxu0 0.0
        %780 = vmatpush1.msra.mxu0 0.0
        %781 = vmatprep.subr.mxu0 0.0
        %782 = vmatpush1.msra.mxu0 0.0
        %783 = vmatprep.subr.mxu0 0.0
        %784 = vmatpush1.msra.mxu0 0.0
        %785 = vmatprep.subr.mxu0 0.0
        %786 = vmatpush1.msra.mxu0 0.0
        %787 = vmatprep.subr.mxu0 0.0
        %788 = vmatpush1.msra.mxu0 0.0
        %789 = vmatprep.subr.mxu0 0.0
        %790 = vmatpush1.msra.mxu0 0.0
        %791 = vmatprep.subr.mxu0 0.0
        %792 = vmatpush1.msra.mxu0 0.0
        %793 = vmatprep.subr.mxu0 0.0
        %794 = vmatpush1.msra.mxu0 0.0
        %795 = vmatprep.subr.mxu0 0.0
        %796 = vmatpush1.msra.mxu0 0.0
        %797 = vmatprep.subr.mxu0 0.0
        %798 = vmatpush1.msra.mxu0 0.0
        %799 = vmatprep.mubr.f32.mxu0 0.0
        %v800 = vand.u32 %v186, 4294901760
        %801 = vmatmul.mubr.f32.gmra.mrb[0].mxu0 %v800
        %v802 = vpop.f32.mrb[0].mxu0
        %v803 = vadd.f32 %v684, %v802
        %v804 = vpop.f32.mrb[0].mxu0
        %805 = vdwg.mxu0
        %806 = vmatprep.subr.mxu0 0.0
        %v807 = vand.u32 %v236, 4294901760
        %808 = vmatpush1.msra.mxu0 %v807
        %809 = vmatprep.subr.mxu0 0.0
        %v810 = vand.u32 %v237, 4294901760
        %811 = vmatpush1.msra.mxu0 %v810
        %812 = vmatprep.subr.mxu0 0.0
        %v813 = vand.u32 %v238, 4294901760
        %814 = vmatpush1.msra.mxu0 %v813
        %815 = vmatprep.subr.mxu0 0.0
        %v816 = vand.u32 %v239, 4294901760
        %817 = vmatpush1.msra.mxu0 %v816
        %818 = vmatprep.subr.mxu0 0.0
        %v819 = vand.u32 %v240, 4294901760
        %820 = vmatpush1.msra.mxu0 %v819
        %821 = vmatprep.subr.mxu0 0.0
        %v822 = vand.u32 %v241, 4294901760
        %823 = vmatpush1.msra.mxu0 %v822
        %824 = vmatprep.subr.mxu0 0.0
        %v825 = vand.u32 %v242, 4294901760
        %826 = vmatpush1.msra.mxu0 %v825
        %827 = vmatprep.subr.mxu0 0.0
        %v828 = vand.u32 %v243, 4294901760
        %829 = vmatpush1.msra.mxu0 %v828
        %830 = vmatprep.subr.mxu0 0.0
        %v831 = vand.u32 %v244, 4294901760
        %832 = vmatpush1.msra.mxu0 %v831
        %833 = vmatprep.subr.mxu0 0.0
        %v834 = vand.u32 %v245, 4294901760
        %835 = vmatpush1.msra.mxu0 %v834
        %836 = vmatprep.subr.mxu0 0.0
        %v837 = vand.u32 %v246, 4294901760
        %838 = vmatpush1.msra.mxu0 %v837
        %839 = vmatprep.subr.mxu0 0.0
        %v840 = vand.u32 %v247, 4294901760
        %841 = vmatpush1.msra.mxu0 %v840
        %842 = vmatprep.subr.mxu0 0.0
        %v843 = vand.u32 %v248, 4294901760
        %844 = vmatpush1.msra.mxu0 %v843
        %845 = vmatprep.subr.mxu0 0.0
        %v846 = vand.u32 %v249, 4294901760
        %847 = vmatpush1.msra.mxu0 %v846
        %848 = vmatprep.subr.mxu0 0.0
        %v849 = vand.u32 %v250, 4294901760
        %850 = vmatpush1.msra.mxu0 %v849
        %851 = vmatprep.subr.mxu0 0.0
        %v852 = vand.u32 %v251, 4294901760
        %853 = vmatpush1.msra.mxu0 %v852
        %854 = vmatprep.subr.mxu0 0.0
        %855 = vmatpush1.msra.mxu0 0.0
        %856 = vmatprep.subr.mxu0 0.0
        %857 = vmatpush1.msra.mxu0 0.0
        %858 = vmatprep.subr.mxu0 0.0
        %859 = vmatpush1.msra.mxu0 0.0
        %860 = vmatprep.subr.mxu0 0.0
        %861 = vmatpush1.msra.mxu0 0.0
        %862 = vmatprep.subr.mxu0 0.0
        %863 = vmatpush1.msra.mxu0 0.0
        %864 = vmatprep.subr.mxu0 0.0
        %865 = vmatpush1.msra.mxu0 0.0
        %866 = vmatprep.subr.mxu0 0.0
        %867 = vmatpush1.msra.mxu0 0.0
        %868 = vmatprep.subr.mxu0 0.0
        %869 = vmatpush1.msra.mxu0 0.0
        %870 = vmatprep.subr.mxu0 0.0
        %871 = vmatpush1.msra.mxu0 0.0
        %872 = vmatprep.subr.mxu0 0.0
        %873 = vmatpush1.msra.mxu0 0.0
        %874 = vmatprep.subr.mxu0 0.0
        %875 = vmatpush1.msra.mxu0 0.0
        %876 = vmatprep.subr.mxu0 0.0
        %877 = vmatpush1.msra.mxu0 0.0
        %878 = vmatprep.subr.mxu0 0.0
        %879 = vmatpush1.msra.mxu0 0.0
        %880 = vmatprep.subr.mxu0 0.0
        %881 = vmatpush1.msra.mxu0 0.0
        %882 = vmatprep.subr.mxu0 0.0
        %883 = vmatpush1.msra.mxu0 0.0
        %884 = vmatprep.subr.mxu0 0.0
        %885 = vmatpush1.msra.mxu0 0.0
        %886 = vmatprep.mubr.f32.mxu0 0.0
        %v887 = vand.u32 %v186, 4294901760
        %888 = vmatmul.mubr.f32.gmra.mrb[0].mxu0 %v887
        %v889 = vpop.f32.mrb[0].mxu0
        %v890 = vadd.f32 %v803, %v889
        %v891 = vpop.f32.mrb[0].mxu0
        %892 = vdwg.mxu0
        %v893 = vmul.f32 %v890, 0.03125
        %895 = vset.pattern.permute.xlu0 0
        %896 = vperm.xlu0 %895, %v893
        %v897 = vpop.permute.xlu0 %896
        %v899 = vsub.f32 %v186, %v897
        %v900 = vmul.f32 %v899, %v899
        %901 = vmatprep.subr.mxu0 0.0
        %v902 = vand.u32 %v236, 4294901760
        %903 = vmatpush1.msra.mxu0 %v902
        %904 = vmatprep.subr.mxu0 0.0
        %v905 = vand.u32 %v237, 4294901760
        %906 = vmatpush1.msra.mxu0 %v905
        %907 = vmatprep.subr.mxu0 0.0
        %v908 = vand.u32 %v238, 4294901760
        %909 = vmatpush1.msra.mxu0 %v908
        %910 = vmatprep.subr.mxu0 0.0
        %v911 = vand.u32 %v239, 4294901760
        %912 = vmatpush1.msra.mxu0 %v911
        %913 = vmatprep.subr.mxu0 0.0
        %v914 = vand.u32 %v240, 4294901760
        %915 = vmatpush1.msra.mxu0 %v914
        %916 = vmatprep.subr.mxu0 0.0
        %v917 = vand.u32 %v241, 4294901760
        %918 = vmatpush1.msra.mxu0 %v917
        %919 = vmatprep.subr.mxu0 0.0
        %v920 = vand.u32 %v242, 4294901760
        %921 = vmatpush1.msra.mxu0 %v920
        %922 = vmatprep.subr.mxu0 0.0
        %v923 = vand.u32 %v243, 4294901760
        %924 = vmatpush1.msra.mxu0 %v923
        %925 = vmatprep.subr.mxu0 0.0
        %v926 = vand.u32 %v244, 4294901760
        %927 = vmatpush1.msra.mxu0 %v926
        %928 = vmatprep.subr.mxu0 0.0
        %v929 = vand.u32 %v245, 4294901760
        %930 = vmatpush1.msra.mxu0 %v929
        %931 = vmatprep.subr.mxu0 0.0
        %v932 = vand.u32 %v246, 4294901760
        %933 = vmatpush1.msra.mxu0 %v932
        %934 = vmatprep.subr.mxu0 0.0
        %v935 = vand.u32 %v247, 4294901760
        %936 = vmatpush1.msra.mxu0 %v935
        %937 = vmatprep.subr.mxu0 0.0
        %v938 = vand.u32 %v248, 4294901760
        %939 = vmatpush1.msra.mxu0 %v938
        %940 = vmatprep.subr.mxu0 0.0
        %v941 = vand.u32 %v249, 4294901760
        %942 = vmatpush1.msra.mxu0 %v941
        %943 = vmatprep.subr.mxu0 0.0
        %v944 = vand.u32 %v250, 4294901760
        %945 = vmatpush1.msra.mxu0 %v944
        %946 = vmatprep.subr.mxu0 0.0
        %v947 = vand.u32 %v251, 4294901760
        %948 = vmatpush1.msra.mxu0 %v947
        %949 = vmatprep.subr.mxu0 0.0
        %950 = vmatpush1.msra.mxu0 0.0
        %951 = vmatprep.subr.mxu0 0.0
        %952 = vmatpush1.msra.mxu0 0.0
        %953 = vmatprep.subr.mxu0 0.0
        %954 = vmatpush1.msra.mxu0 0.0
        %955 = vmatprep.subr.mxu0 0.0
        %956 = vmatpush1.msra.mxu0 0.0
        %957 = vmatprep.subr.mxu0 0.0
        %958 = vmatpush1.msra.mxu0 0.0
        %959 = vmatprep.subr.mxu0 0.0
        %960 = vmatpush1.msra.mxu0 0.0
        %961 = vmatprep.subr.mxu0 0.0
        %962 = vmatpush1.msra.mxu0 0.0
        %963 = vmatprep.subr.mxu0 0.0
        %964 = vmatpush1.msra.mxu0 0.0
        %965 = vmatprep.subr.mxu0 0.0
        %966 = vmatpush1.msra.mxu0 0.0
        %967 = vmatprep.subr.mxu0 0.0
        %968 = vmatpush1.msra.mxu0 0.0
        %969 = vmatprep.subr.mxu0 0.0
        %970 = vmatpush1.msra.mxu0 0.0
        %971 = vmatprep.subr.mxu0 0.0
        %972 = vmatpush1.msra.mxu0 0.0
        %973 = vmatprep.subr.mxu0 0.0
        %974 = vmatpush1.msra.mxu0 0.0
        %975 = vmatprep.subr.mxu0 0.0
        %976 = vmatpush1.msra.mxu0 0.0
        %977 = vmatprep.subr.mxu0 0.0
        %978 = vmatpush1.msra.mxu0 0.0
        %979 = vmatprep.subr.mxu0 0.0
        %980 = vmatpush1.msra.mxu0 0.0
        %981 = vmatprep.mubr.f32.mxu0 0.0
        %v982 = vand.u32 %v900, 4294901760
        %v983 = vsub.f32 %v900, %v982
        %v984 = vand.u32 %v983, 4294901760
        %v985 = vsub.f32 %v983, %v984
        %v986 = vand.u32 %v985, 4294901760
        %987 = vmatmul.mubr.f32.gmra.mrb[0].mxu0 %v986
        %v988 = vpop.f32.mrb[0].mxu0
        %v989 = vadd.f32 0.0, %v988
        %v990 = vpop.f32.mrb[0].mxu0
        %991 = vdwg.mxu0
        %992 = vmatprep.subr.mxu0 0.0
        %v993 = vand.u32 %v236, 4294901760
        %v994 = vsub.f32 %v236, %v993
        %v995 = vand.u32 %v994, 4294901760
        %v996 = vsub.f32 %v994, %v995
        %v997 = vand.u32 %v996, 4294901760
        %998 = vmatpush1.msra.mxu0 %v997
        %999 = vmatprep.subr.mxu0 0.0
        %v1000 = vand.u32 %v237, 4294901760
        %v1001 = vsub.f32 %v237, %v1000
        %v1002 = vand.u32 %v1001, 4294901760
        %v1003 = vsub.f32 %v1001, %v1002
        %v1004 = vand.u32 %v1003, 4294901760
        %1005 = vmatpush1.msra.mxu0 %v1004
        %1006 = vmatprep.subr.mxu0 0.0
        %v1007 = vand.u32 %v238, 4294901760
        %v1008 = vsub.f32 %v238, %v1007
        %v1009 = vand.u32 %v1008, 4294901760
        %v1010 = vsub.f32 %v1008, %v1009
        %v1011 = vand.u32 %v1010, 4294901760
        %1012 = vmatpush1.msra.mxu0 %v1011
        %1013 = vmatprep.subr.mxu0 0.0
        %v1014 = vand.u32 %v239, 4294901760
        %v1015 = vsub.f32 %v239, %v1014
        %v1016 = vand.u32 %v1015, 4294901760
        %v1017 = vsub.f32 %v1015, %v1016
        %v1018 = vand.u32 %v1017, 4294901760
        %1019 = vmatpush1.msra.mxu0 %v1018
        %1020 = vmatprep.subr.mxu0 0.0
        %v1021 = vand.u32 %v240, 4294901760
        %v1022 = vsub.f32 %v240, %v1021
        %v1023 = vand.u32 %v1022, 4294901760
        %v1024 = vsub.f32 %v1022, %v1023
        %v1025 = vand.u32 %v1024, 4294901760
        %1026 = vmatpush1.msra.mxu0 %v1025
        %1027 = vmatprep.subr.mxu0 0.0
        %v1028 = vand.u32 %v241, 4294901760
        %v1029 = vsub.f32 %v241, %v1028
        %v1030 = vand.u32 %v1029, 4294901760
        %v1031 = vsub.f32 %v1029, %v1030
        %v1032 = vand.u32 %v1031, 4294901760
        %1033 = vmatpush1.msra.mxu0 %v1032
        %1034 = vmatprep.subr.mxu0 0.0
        %v1035 = vand.u32 %v242, 4294901760
        %v1036 = vsub.f32 %v242, %v1035
        %v1037 = vand.u32 %v1036, 4294901760
        %v1038 = vsub.f32 %v1036, %v1037
        %v1039 = vand.u32 %v1038, 4294901760
        %1040 = vmatpush1.msra.mxu0 %v1039
        %1041 = vmatprep.subr.mxu0 0.0
        %v1042 = vand.u32 %v243, 4294901760
        %v1043 = vsub.f32 %v243, %v1042
        %v1044 = vand.u32 %v1043, 4294901760
        %v1045 = vsub.f32 %v1043, %v1044
        %v1046 = vand.u32 %v1045, 4294901760
        %1047 = vmatpush1.msra.mxu0 %v1046
        %1048 = vmatprep.subr.mxu0 0.0
        %v1049 = vand.u32 %v244, 4294901760
        %v1050 = vsub.f32 %v244, %v1049
        %v1051 = vand.u32 %v1050, 4294901760
        %v1052 = vsub.f32 %v1050, %v1051
        %v1053 = vand.u32 %v1052, 4294901760
        %1054 = vmatpush1.msra.mxu0 %v1053
        %1055 = vmatprep.subr.mxu0 0.0
        %v1056 = vand.u32 %v245, 4294901760
        %v1057 = vsub.f32 %v245, %v1056
        %v1058 = vand.u32 %v1057, 4294901760
        %v1059 = vsub.f32 %v1057, %v1058
        %v1060 = vand.u32 %v1059, 4294901760
        %1061 = vmatpush1.msra.mxu0 %v1060
        %1062 = vmatprep.subr.mxu0 0.0
        %v1063 = vand.u32 %v246, 4294901760
        %v1064 = vsub.f32 %v246, %v1063
        %v1065 = vand.u32 %v1064, 4294901760
        %v1066 = vsub.f32 %v1064, %v1065
        %v1067 = vand.u32 %v1066, 4294901760
        %1068 = vmatpush1.msra.mxu0 %v1067
        %1069 = vmatprep.subr.mxu0 0.0
        %v1070 = vand.u32 %v247, 4294901760
        %v1071 = vsub.f32 %v247, %v1070
        %v1072 = vand.u32 %v1071, 4294901760
        %v1073 = vsub.f32 %v1071, %v1072
        %v1074 = vand.u32 %v1073, 4294901760
        %1075 = vmatpush1.msra.mxu0 %v1074
        %1076 = vmatprep.subr.mxu0 0.0
        %v1077 = vand.u32 %v248, 4294901760
        %v1078 = vsub.f32 %v248, %v1077
        %v1079 = vand.u32 %v1078, 4294901760
        %v1080 = vsub.f32 %v1078, %v1079
        %v1081 = vand.u32 %v1080, 4294901760
        %1082 = vmatpush1.msra.mxu0 %v1081
        %1083 = vmatprep.subr.mxu0 0.0
        %v1084 = vand.u32 %v249, 4294901760
        %v1085 = vsub.f32 %v249, %v1084
        %v1086 = vand.u32 %v1085, 4294901760
        %v1087 = vsub.f32 %v1085, %v1086
        %v1088 = vand.u32 %v1087, 4294901760
        %1089 = vmatpush1.msra.mxu0 %v1088
        %1090 = vmatprep.subr.mxu0 0.0
        %v1091 = vand.u32 %v250, 4294901760
        %v1092 = vsub.f32 %v250, %v1091
        %v1093 = vand.u32 %v1092, 4294901760
        %v1094 = vsub.f32 %v1092, %v1093
        %v1095 = vand.u32 %v1094, 4294901760
        %1096 = vmatpush1.msra.mxu0 %v1095
        %1097 = vmatprep.subr.mxu0 0.0
        %v1098 = vand.u32 %v251, 4294901760
        %v1099 = vsub.f32 %v251, %v1098
        %v1100 = vand.u32 %v1099, 4294901760
        %v1101 = vsub.f32 %v1099, %v1100
        %v1102 = vand.u32 %v1101, 4294901760
        %1103 = vmatpush1.msra.mxu0 %v1102
        %1104 = vmatprep.subr.mxu0 0.0
        %1105 = vmatpush1.msra.mxu0 0.0
        %1106 = vmatprep.subr.mxu0 0.0
        %1107 = vmatpush1.msra.mxu0 0.0
        %1108 = vmatprep.subr.mxu0 0.0
        %1109 = vmatpush1.msra.mxu0 0.0
        %1110 = vmatprep.subr.mxu0 0.0
        %1111 = vmatpush1.msra.mxu0 0.0
        %1112 = vmatprep.subr.mxu0 0.0
        %1113 = vmatpush1.msra.mxu0 0.0
        %1114 = vmatprep.subr.mxu0 0.0
        %1115 = vmatpush1.msra.mxu0 0.0
        %1116 = vmatprep.subr.mxu0 0.0
        %1117 = vmatpush1.msra.mxu0 0.0
        %1118 = vmatprep.subr.mxu0 0.0
        %1119 = vmatpush1.msra.mxu0 0.0
        %1120 = vmatprep.subr.mxu0 0.0
        %1121 = vmatpush1.msra.mxu0 0.0
        %1122 = vmatprep.subr.mxu0 0.0
        %1123 = vmatpush1.msra.mxu0 0.0
        %1124 = vmatprep.subr.mxu0 0.0
        %1125 = vmatpush1.msra.mxu0 0.0
        %1126 = vmatprep.subr.mxu0 0.0
        %1127 = vmatpush1.msra.mxu0 0.0
        %1128 = vmatprep.subr.mxu0 0.0
        %1129 = vmatpush1.msra.mxu0 0.0
        %1130 = vmatprep.subr.mxu0 0.0
        %1131 = vmatpush1.msra.mxu0 0.0
        %1132 = vmatprep.subr.mxu0 0.0
        %1133 = vmatpush1.msra.mxu0 0.0
        %1134 = vmatprep.subr.mxu0 0.0
        %1135 = vmatpush1.msra.mxu0 0.0
        %1136 = vmatprep.mubr.f32.mxu0 0.0
        %v1137 = vand.u32 %v900, 4294901760
        %1138 = vmatmul.mubr.f32.gmra.mrb[0].mxu0 %v1137
        %v1139 = vpop.f32.mrb[0].mxu0
        %v1140 = vadd.f32 %v989, %v1139
        %v1141 = vpop.f32.mrb[0].mxu0
        %1142 = vdwg.mxu0
        %1143 = vmatprep.subr.mxu0 0.0
        %v1144 = vand.u32 %v236, 4294901760
        %v1145 = vsub.f32 %v236, %v1144
        %1146 = vmatpush1.msra.mxu0 %v1145
        %1147 = vmatprep.subr.mxu0 0.0
        %v1148 = vand.u32 %v237, 4294901760
        %v1149 = vsub.f32 %v237, %v1148
        %1150 = vmatpush1.msra.mxu0 %v1149
        %1151 = vmatprep.subr.mxu0 0.0
        %v1152 = vand.u32 %v238, 4294901760
        %v1153 = vsub.f32 %v238, %v1152
        %1154 = vmatpush1.msra.mxu0 %v1153
        %1155 = vmatprep.subr.mxu0 0.0
        %v1156 = vand.u32 %v239, 4294901760
        %v1157 = vsub.f32 %v239, %v1156
        %1158 = vmatpush1.msra.mxu0 %v1157
        %1159 = vmatprep.subr.mxu0 0.0
        %v1160 = vand.u32 %v240, 4294901760
        %v1161 = vsub.f32 %v240, %v1160
        %1162 = vmatpush1.msra.mxu0 %v1161
        %1163 = vmatprep.subr.mxu0 0.0
        %v1164 = vand.u32 %v241, 4294901760
        %v1165 = vsub.f32 %v241, %v1164
        %1166 = vmatpush1.msra.mxu0 %v1165
        %1167 = vmatprep.subr.mxu0 0.0
        %v1168 = vand.u32 %v242, 4294901760
        %v1169 = vsub.f32 %v242, %v1168
        %1170 = vmatpush1.msra.mxu0 %v1169
        %1171 = vmatprep.subr.mxu0 0.0
        %v1172 = vand.u32 %v243, 4294901760
        %v1173 = vsub.f32 %v243, %v1172
        %1174 = vmatpush1.msra.mxu0 %v1173
        %1175 = vmatprep.subr.mxu0 0.0
        %v1176 = vand.u32 %v244, 4294901760
        %v1177 = vsub.f32 %v244, %v1176
        %1178 = vmatpush1.msra.mxu0 %v1177
        %1179 = vmatprep.subr.mxu0 0.0
        %v1180 = vand.u32 %v245, 4294901760
        %v1181 = vsub.f32 %v245, %v1180
        %1182 = vmatpush1.msra.mxu0 %v1181
        %1183 = vmatprep.subr.mxu0 0.0
        %v1184 = vand.u32 %v246, 4294901760
        %v1185 = vsub.f32 %v246, %v1184
        %1186 = vmatpush1.msra.mxu0 %v1185
        %1187 = vmatprep.subr.mxu0 0.0
        %v1188 = vand.u32 %v247, 4294901760
        %v1189 = vsub.f32 %v247, %v1188
        %1190 = vmatpush1.msra.mxu0 %v1189
        %1191 = vmatprep.subr.mxu0 0.0
        %v1192 = vand.u32 %v248, 4294901760
        %v1193 = vsub.f32 %v248, %v1192
        %1194 = vmatpush1.msra.mxu0 %v1193
        %1195 = vmatprep.subr.mxu0 0.0
        %v1196 = vand.u32 %v249, 4294901760
        %v1197 = vsub.f32 %v249, %v1196
        %1198 = vmatpush1.msra.mxu0 %v1197
        %1199 = vmatprep.subr.mxu0 0.0
        %v1200 = vand.u32 %v250, 4294901760
        %v1201 = vsub.f32 %v250, %v1200
        %1202 = vmatpush1.msra.mxu0 %v1201
        %1203 = vmatprep.subr.mxu0 0.0
        %v1204 = vand.u32 %v251, 4294901760
        %v1205 = vsub.f32 %v251, %v1204
        %1206 = vmatpush1.msra.mxu0 %v1205
        %1207 = vmatprep.subr.mxu0 0.0
        %1208 = vmatpush1.msra.mxu0 0.0
        %1209 = vmatprep.subr.mxu0 0.0
        %1210 = vmatpush1.msra.mxu0 0.0
        %1211 = vmatprep.subr.mxu0 0.0
        %1212 = vmatpush1.msra.mxu0 0.0
        %1213 = vmatprep.subr.mxu0 0.0
        %1214 = vmatpush1.msra.mxu0 0.0
        %1215 = vmatprep.subr.mxu0 0.0
        %1216 = vmatpush1.msra.mxu0 0.0
        %1217 = vmatprep.subr.mxu0 0.0
        %1218 = vmatpush1.msra.mxu0 0.0
        %1219 = vmatprep.subr.mxu0 0.0
        %1220 = vmatpush1.msra.mxu0 0.0
        %1221 = vmatprep.subr.mxu0 0.0
        %1222 = vmatpush1.msra.mxu0 0.0
        %1223 = vmatprep.subr.mxu0 0.0
        %1224 = vmatpush1.msra.mxu0 0.0
        %1225 = vmatprep.subr.mxu0 0.0
        %1226 = vmatpush1.msra.mxu0 0.0
        %1227 = vmatprep.subr.mxu0 0.0
        %1228 = vmatpush1.msra.mxu0 0.0
        %1229 = vmatprep.subr.mxu0 0.0
        %1230 = vmatpush1.msra.mxu0 0.0
        %1231 = vmatprep.subr.mxu0 0.0
        %1232 = vmatpush1.msra.mxu0 0.0
        %1233 = vmatprep.subr.mxu0 0.0
        %1234 = vmatpush1.msra.mxu0 0.0
        %1235 = vmatprep.subr.mxu0 0.0
        %1236 = vmatpush1.msra.mxu0 0.0
        %1237 = vmatprep.subr.mxu0 0.0
        %1238 = vmatpush1.msra.mxu0 0.0
        %1239 = vmatprep.mubr.f32.mxu0 0.0
        %v1240 = vand.u32 %v900, 4294901760
        %v1241 = vsub.f32 %v900, %v1240
        %1242 = vmatmul.mubr.f32.gmra.mrb[0].mxu0 %v1241
        %v1243 = vpop.f32.mrb[0].mxu0
        %v1244 = vadd.f32 %v1140, %v1243
        %v1245 = vpop.f32.mrb[0].mxu0
        %1246 = vdwg.mxu0
        %1247 = vmatprep.subr.mxu0 0.0
        %v1248 = vand.u32 %v236, 4294901760
        %1249 = vmatpush1.msra.mxu0 %v1248
        %1250 = vmatprep.subr.mxu0 0.0
        %v1251 = vand.u32 %v237, 4294901760
        %1252 = vmatpush1.msra.mxu0 %v1251
        %1253 = vmatprep.subr.mxu0 0.0
        %v1254 = vand.u32 %v238, 4294901760
        %1255 = vmatpush1.msra.mxu0 %v1254
        %1256 = vmatprep.subr.mxu0 0.0
        %v1257 = vand.u32 %v239, 4294901760
        %1258 = vmatpush1.msra.mxu0 %v1257
        %1259 = vmatprep.subr.mxu0 0.0
        %v1260 = vand.u32 %v240, 4294901760
        %1261 = vmatpush1.msra.mxu0 %v1260
        %1262 = vmatprep.subr.mxu0 0.0
        %v1263 = vand.u32 %v241, 4294901760
        %1264 = vmatpush1.msra.mxu0 %v1263
        %1265 = vmatprep.subr.mxu0 0.0
        %v1266 = vand.u32 %v242, 4294901760
        %1267 = vmatpush1.msra.mxu0 %v1266
        %1268 = vmatprep.subr.mxu0 0.0
        %v1269 = vand.u32 %v243, 4294901760
        %1270 = vmatpush1.msra.mxu0 %v1269
        %1271 = vmatprep.subr.mxu0 0.0
        %v1272 = vand.u32 %v244, 4294901760
        %1273 = vmatpush1.msra.mxu0 %v1272
        %1274 = vmatprep.subr.mxu0 0.0
        %v1275 = vand.u32 %v245, 4294901760
        %1276 = vmatpush1.msra.mxu0 %v1275
        %1277 = vmatprep.subr.mxu0 0.0
        %v1278 = vand.u32 %v246, 4294901760
        %1279 = vmatpush1.msra.mxu0 %v1278
        %1280 = vmatprep.subr.mxu0 0.0
        %v1281 = vand.u32 %v247, 4294901760
        %1282 = vmatpush1.msra.mxu0 %v1281
        %1283 = vmatprep.subr.mxu0 0.0
        %v1284 = vand.u32 %v248, 4294901760
        %1285 = vmatpush1.msra.mxu0 %v1284
        %1286 = vmatprep.subr.mxu0 0.0
        %v1287 = vand.u32 %v249, 4294901760
        %1288 = vmatpush1.msra.mxu0 %v1287
        %1289 = vmatprep.subr.mxu0 0.0
        %v1290 = vand.u32 %v250, 4294901760
        %1291 = vmatpush1.msra.mxu0 %v1290
        %1292 = vmatprep.subr.mxu0 0.0
        %v1293 = vand.u32 %v251, 4294901760
        %1294 = vmatpush1.msra.mxu0 %v1293
        %1295 = vmatprep.subr.mxu0 0.0
        %1296 = vmatpush1.msra.mxu0 0.0
        %1297 = vmatprep.subr.mxu0 0.0
        %1298 = vmatpush1.msra.mxu0 0.0
        %1299 = vmatprep.subr.mxu0 0.0
        %1300 = vmatpush1.msra.mxu0 0.0
        %1301 = vmatprep.subr.mxu0 0.0
        %1302 = vmatpush1.msra.mxu0 0.0
        %1303 = vmatprep.subr.mxu0 0.0
        %1304 = vmatpush1.msra.mxu0 0.0
        %1305 = vmatprep.subr.mxu0 0.0
        %1306 = vmatpush1.msra.mxu0 0.0
        %1307 = vmatprep.subr.mxu0 0.0
        %1308 = vmatpush1.msra.mxu0 0.0
        %1309 = vmatprep.subr.mxu0 0.0
        %1310 = vmatpush1.msra.mxu0 0.0
        %1311 = vmatprep.subr.mxu0 0.0
        %1312 = vmatpush1.msra.mxu0 0.0
        %1313 = vmatprep.subr.mxu0 0.0
        %1314 = vmatpush1.msra.mxu0 0.0
        %1315 = vmatprep.subr.mxu0 0.0
        %1316 = vmatpush1.msra.mxu0 0.0
        %1317 = vmatprep.subr.mxu0 0.0
        %1318 = vmatpush1.msra.mxu0 0.0
        %1319 = vmatprep.subr.mxu0 0.0
        %1320 = vmatpush1.msra.mxu0 0.0
        %1321 = vmatprep.subr.mxu0 0.0
        %1322 = vmatpush1.msra.mxu0 0.0
        %1323 = vmatprep.subr.mxu0 0.0
        %1324 = vmatpush1.msra.mxu0 0.0
        %1325 = vmatprep.subr.mxu0 0.0
        %1326 = vmatpush1.msra.mxu0 0.0
        %1327 = vmatprep.mubr.f32.mxu0 0.0
        %v1328 = vand.u32 %v900, 4294901760
        %v1329 = vsub.f32 %v900, %v1328
        %v1330 = vand.u32 %v1329, 4294901760
        %1331 = vmatmul.mubr.f32.gmra.mrb[0].mxu0 %v1330
        %v1332 = vpop.f32.mrb[0].mxu0
        %v1333 = vadd.f32 %v1244, %v1332
        %v1334 = vpop.f32.mrb[0].mxu0
        %1335 = vdwg.mxu0
        %1336 = vmatprep.subr.mxu0 0.0
        %v1337 = vand.u32 %v236, 4294901760
        %v1338 = vsub.f32 %v236, %v1337
        %v1339 = vand.u32 %v1338, 4294901760
        %1340 = vmatpush1.msra.mxu0 %v1339
        %1341 = vmatprep.subr.mxu0 0.0
        %v1342 = vand.u32 %v237, 4294901760
        %v1343 = vsub.f32 %v237, %v1342
        %v1344 = vand.u32 %v1343, 4294901760
        %1345 = vmatpush1.msra.mxu0 %v1344
        %1346 = vmatprep.subr.mxu0 0.0
        %v1347 = vand.u32 %v238, 4294901760
        %v1348 = vsub.f32 %v238, %v1347
        %v1349 = vand.u32 %v1348, 4294901760
        %1350 = vmatpush1.msra.mxu0 %v1349
        %1351 = vmatprep.subr.mxu0 0.0
        %v1352 = vand.u32 %v239, 4294901760
        %v1353 = vsub.f32 %v239, %v1352
        %v1354 = vand.u32 %v1353, 4294901760
        %1355 = vmatpush1.msra.mxu0 %v1354
        %1356 = vmatprep.subr.mxu0 0.0
        %v1357 = vand.u32 %v240, 4294901760
        %v1358 = vsub.f32 %v240, %v1357
        %v1359 = vand.u32 %v1358, 4294901760
        %1360 = vmatpush1.msra.mxu0 %v1359
        %1361 = vmatprep.subr.mxu0 0.0
        %v1362 = vand.u32 %v241, 4294901760
        %v1363 = vsub.f32 %v241, %v1362
        %v1364 = vand.u32 %v1363, 4294901760
        %1365 = vmatpush1.msra.mxu0 %v1364
        %1366 = vmatprep.subr.mxu0 0.0
        %v1367 = vand.u32 %v242, 4294901760
        %v1368 = vsub.f32 %v242, %v1367
        %v1369 = vand.u32 %v1368, 4294901760
        %1370 = vmatpush1.msra.mxu0 %v1369
        %1371 = vmatprep.subr.mxu0 0.0
        %v1372 = vand.u32 %v243, 4294901760
        %v1373 = vsub.f32 %v243, %v1372
        %v1374 = vand.u32 %v1373, 4294901760
        %1375 = vmatpush1.msra.mxu0 %v1374
        %1376 = vmatprep.subr.mxu0 0.0
        %v1377 = vand.u32 %v244, 4294901760
        %v1378 = vsub.f32 %v244, %v1377
        %v1379 = vand.u32 %v1378, 4294901760
        %1380 = vmatpush1.msra.mxu0 %v1379
        %1381 = vmatprep.subr.mxu0 0.0
        %v1382 = vand.u32 %v245, 4294901760
        %v1383 = vsub.f32 %v245, %v1382
        %v1384 = vand.u32 %v1383, 4294901760
        %1385 = vmatpush1.msra.mxu0 %v1384
        %1386 = vmatprep.subr.mxu0 0.0
        %v1387 = vand.u32 %v246, 4294901760
        %v1388 = vsub.f32 %v246, %v1387
        %v1389 = vand.u32 %v1388, 4294901760
        %1390 = vmatpush1.msra.mxu0 %v1389
        %1391 = vmatprep.subr.mxu0 0.0
        %v1392 = vand.u32 %v247, 4294901760
        %v1393 = vsub.f32 %v247, %v1392
        %v1394 = vand.u32 %v1393, 4294901760
        %1395 = vmatpush1.msra.mxu0 %v1394
        %1396 = vmatprep.subr.mxu0 0.0
        %v1397 = vand.u32 %v248, 4294901760
        %v1398 = vsub.f32 %v248, %v1397
        %v1399 = vand.u32 %v1398, 4294901760
        %1400 = vmatpush1.msra.mxu0 %v1399
        %1401 = vmatprep.subr.mxu0 0.0
        %v1402 = vand.u32 %v249, 4294901760
        %v1403 = vsub.f32 %v249, %v1402
        %v1404 = vand.u32 %v1403, 4294901760
        %1405 = vmatpush1.msra.mxu0 %v1404
        %1406 = vmatprep.subr.mxu0 0.0
        %v1407 = vand.u32 %v250, 4294901760
        %v1408 = vsub.f32 %v250, %v1407
        %v1409 = vand.u32 %v1408, 4294901760
        %1410 = vmatpush1.msra.mxu0 %v1409
        %1411 = vmatprep.subr.mxu0 0.0
        %v1412 = vand.u32 %v251, 4294901760
        %v1413 = vsub.f32 %v251, %v1412
        %v1414 = vand.u32 %v1413, 4294901760
        %1415 = vmatpush1.msra.mxu0 %v1414
        %1416 = vmatprep.subr.mxu0 0.0
        %1417 = vmatpush1.msra.mxu0 0.0
        %1418 = vmatprep.subr.mxu0 0.0
        %1419 = vmatpush1.msra.mxu0 0.0
        %1420 = vmatprep.subr.mxu0 0.0
        %1421 = vmatpush1.msra.mxu0 0.0
        %1422 = vmatprep.subr.mxu0 0.0
        %1423 = vmatpush1.msra.mxu0 0.0
        %1424 = vmatprep.subr.mxu0 0.0
        %1425 = vmatpush1.msra.mxu0 0.0
        %1426 = vmatprep.subr.mxu0 0.0
        %1427 = vmatpush1.msra.mxu0 0.0
        %1428 = vmatprep.subr.mxu0 0.0
        %1429 = vmatpush1.msra.mxu0 0.0
        %1430 = vmatprep.subr.mxu0 0.0
        %1431 = vmatpush1.msra.mxu0 0.0
        %1432 = vmatprep.subr.mxu0 0.0
        %1433 = vmatpush1.msra.mxu0 0.0
        %1434 = vmatprep.subr.mxu0 0.0
        %1435 = vmatpush1.msra.mxu0 0.0
        %1436 = vmatprep.subr.mxu0 0.0
        %1437 = vmatpush1.msra.mxu0 0.0
        %1438 = vmatprep.subr.mxu0 0.0
        %1439 = vmatpush1.msra.mxu0 0.0
        %1440 = vmatprep.subr.mxu0 0.0
        %1441 = vmatpush1.msra.mxu0 0.0
        %1442 = vmatprep.subr.mxu0 0.0
        %1443 = vmatpush1.msra.mxu0 0.0
        %1444 = vmatprep.subr.mxu0 0.0
        %1445 = vmatpush1.msra.mxu0 0.0
        %1446 = vmatprep.subr.mxu0 0.0
        %1447 = vmatpush1.msra.mxu0 0.0
        %1448 = vmatprep.mubr.f32.mxu0 0.0
        %v1449 = vand.u32 %v900, 4294901760
        %1450 = vmatmul.mubr.f32.gmra.mrb[0].mxu0 %v1449
        %v1451 = vpop.f32.mrb[0].mxu0
        %v1452 = vadd.f32 %v1333, %v1451
        %v1453 = vpop.f32.mrb[0].mxu0
        %1454 = vdwg.mxu0
        %1455 = vmatprep.subr.mxu0 0.0
        %v1456 = vand.u32 %v236, 4294901760
        %1457 = vmatpush1.msra.mxu0 %v1456
        %1458 = vmatprep.subr.mxu0 0.0
        %v1459 = vand.u32 %v237, 4294901760
        %1460 = vmatpush1.msra.mxu0 %v1459
        %1461 = vmatprep.subr.mxu0 0.0
        %v1462 = vand.u32 %v238, 4294901760
        %1463 = vmatpush1.msra.mxu0 %v1462
        %1464 = vmatprep.subr.mxu0 0.0
        %v1465 = vand.u32 %v239, 4294901760
        %1466 = vmatpush1.msra.mxu0 %v1465
        %1467 = vmatprep.subr.mxu0 0.0
        %v1468 = vand.u32 %v240, 4294901760
        %1469 = vmatpush1.msra.mxu0 %v1468
        %1470 = vmatprep.subr.mxu0 0.0
        %v1471 = vand.u32 %v241, 4294901760
        %1472 = vmatpush1.msra.mxu0 %v1471
        %1473 = vmatprep.subr.mxu0 0.0
        %v1474 = vand.u32 %v242, 4294901760
        %1475 = vmatpush1.msra.mxu0 %v1474
        %1476 = vmatprep.subr.mxu0 0.0
        %v1477 = vand.u32 %v243, 4294901760
        %1478 = vmatpush1.msra.mxu0 %v1477
        %1479 = vmatprep.subr.mxu0 0.0
        %v1480 = vand.u32 %v244, 4294901760
        %1481 = vmatpush1.msra.mxu0 %v1480
        %1482 = vmatprep.subr.mxu0 0.0
        %v1483 = vand.u32 %v245, 4294901760
        %1484 = vmatpush1.msra.mxu0 %v1483
        %1485 = vmatprep.subr.mxu0 0.0
        %v1486 = vand.u32 %v246, 4294901760
        %1487 = vmatpush1.msra.mxu0 %v1486
        %1488 = vmatprep.subr.mxu0 0.0
        %v1489 = vand.u32 %v247, 4294901760
        %1490 = vmatpush1.msra.mxu0 %v1489
        %1491 = vmatprep.subr.mxu0 0.0
        %v1492 = vand.u32 %v248, 4294901760
        %1493 = vmatpush1.msra.mxu0 %v1492
        %1494 = vmatprep.subr.mxu0 0.0
        %v1495 = vand.u32 %v249, 4294901760
        %1496 = vmatpush1.msra.mxu0 %v1495
        %1497 = vmatprep.subr.mxu0 0.0
        %v1498 = vand.u32 %v250, 4294901760
        %1499 = vmatpush1.msra.mxu0 %v1498
        %1500 = vmatprep.subr.mxu0 0.0
        %v1501 = vand.u32 %v251, 4294901760
        %1502 = vmatpush1.msra.mxu0 %v1501
        %1503 = vmatprep.subr.mxu0 0.0
        %1504 = vmatpush1.msra.mxu0 0.0
        %1505 = vmatprep.subr.mxu0 0.0
        %1506 = vmatpush1.msra.mxu0 0.0
        %1507 = vmatprep.subr.mxu0 0.0
        %1508 = vmatpush1.msra.mxu0 0.0
        %1509 = vmatprep.subr.mxu0 0.0
        %1510 = vmatpush1.msra.mxu0 0.0
        %1511 = vmatprep.subr.mxu0 0.0
        %1512 = vmatpush1.msra.mxu0 0.0
        %1513 = vmatprep.subr.mxu0 0.0
        %1514 = vmatpush1.msra.mxu0 0.0
        %1515 = vmatprep.subr.mxu0 0.0
        %1516 = vmatpush1.msra.mxu0 0.0
        %1517 = vmatprep.subr.mxu0 0.0
        %1518 = vmatpush1.msra.mxu0 0.0
        %1519 = vmatprep.subr.mxu0 0.0
        %1520 = vmatpush1.msra.mxu0 0.0
        %1521 = vmatprep.subr.mxu0 0.0
        %1522 = vmatpush1.msra.mxu0 0.0
        %1523 = vmatprep.subr.mxu0 0.0
        %1524 = vmatpush1.msra.mxu0 0.0
        %1525 = vmatprep.subr.mxu0 0.0
        %1526 = vmatpush1.msra.mxu0 0.0
        %1527 = vmatprep.subr.mxu0 0.0
        %1528 = vmatpush1.msra.mxu0 0.0
        %1529 = vmatprep.subr.mxu0 0.0
        %1530 = vmatpush1.msra.mxu0 0.0
        %1531 = vmatprep.subr.mxu0 0.0
        %1532 = vmatpush1.msra.mxu0 0.0
        %1533 = vmatprep.subr.mxu0 0.0
        %1534 = vmatpush1.msra.mxu0 0.0
        %1535 = vmatprep.mubr.f32.mxu0 0.0
        %v1536 = vand.u32 %v900, 4294901760
        %1537 = vmatmul.mubr.f32.gmra.mrb[0].mxu0 %v1536
        %v1538 = vpop.f32.mrb[0].mxu0
        %v1539 = vadd.f32 %v1452, %v1538
        %v1540 = vpop.f32.mrb[0].mxu0
        %1541 = vdwg.mxu0
        %v1542 = vmul.f32 %v1539, 0.032258064
        %v1543 = vrsqrt.pop %v1542
        %v1544 = vmul.f32 %v1542, %v1543
        %vm1545 = vcmp.eq.f32.partialorder %v1542, inf
        %v1546 = vsel %vm1545, %v1542, %v1544
        %vm1547 = vcmp.eq.f32.partialorder %v1542, 0.0
        %v1548 = vand.u32 %v1542, 2147483648
        %v1549 = vsel %vm1547, %v1548, %v1546
        %v1550 = vadd.f32 %v1549, 1e-06
        %v1551 = vrcp.pop %v1550
        %v1552 = vld [vmem:[%s1] sm:$0x1]
        %v1553 = vld [vmem:[%s2] sm:$0x1]
        %1555 = vset.pattern.permute.xlu0 0
        %1556 = vperm.xlu0 %1555, %v1551
        %v1557 = vpop.permute.xlu0 %1556
        %v1559 = vmul.f32 %v899, %v1557
        %v1561 = vlaneseq
        %v1562 = vshrl.u32 %v1561, 7
        %v1563 = vsub.s32 0, %v1562
        %v1564 = vrot.slane %v1552, %v1563
        %v1566 = vmul.f32 %v1564, %v1559
        %v1568 = vlaneseq
        %v1569 = vshrl.u32 %v1568, 7
        %v1570 = vsub.s32 0, %v1569
        %v1571 = vrot.slane %v1553, %v1570
        %v1573 = vadd.f32 %v1566, %v1571
        %1574 = vst [vmem:[%s185] sm:$0xff] %v1573
        %s1575 = sand.u32 %s96, 1
        %s1576 = scalar_lea.sflag [#allocation4], %s1575
        %s1577 = sand.u32 %s96, 1
        %s1578 = smul.addr %s1577, 8
        %s1579 = scalar_lea.vmem [#allocation5], %s1578
        // Predicated region
        $region37: #{tpu_custom_call.1} parent=31 // pred_check
          %p1580 = pneg %p106
        $region38: #{tpu_custom_call.1} parent=31 // pred_check_branch
          %1582 = sbr.rel (%p1580) target = $region40
        $region39: #{tpu_custom_call.1} parent=31 // pred_region
          %s1584 = ssub.s32 128, 128
          %1585 = vsyncadd %s1576, %s1584
          %s1586 = smul.addr %s20, 128
          %s1587 = scalar_lea.hbm %s3, %s1586
          %s1589 = sshll.u32 %s1579, 4
          %s1590 = int_to_ptr.vmem [resolvable:$true] %s1589
          %1592 = dma.vmem_to_hbm [thread:$0]  %s1590, 128, %s1587, %s1576
        $region40: #{tpu_custom_call.1} parent=31 // pred_fallthru
          _
      $region32: #{tpu_custom_call.1} parent=5 // pred_fallthru
        _
      %p1593 = scmp.le.s32.totalorder 2, %s15
      // Predicated region
      $region41: #{tpu_custom_call.1} parent=5 // pred_check
        %p1594 = pneg %p1593
      $region42: #{tpu_custom_call.1} parent=5 // pred_check_branch
        %1596 = sbr.rel (%p1594) target = $region44
      $region43: #{tpu_custom_call.1} parent=5 // pred_region
        %s1597 = ssub.s32 %s15, 2
        // Predicated region
        $region45: #{tpu_custom_call.1} parent=43 // pred_check
          %p1598 = pneg %p112
        $region46: #{tpu_custom_call.1} parent=43 // pred_check_branch
          %1600 = sbr.rel (%p1598) target = $region48
        $region47: #{tpu_custom_call.1} parent=43 // pred_region
          %s1601 = sand.u32 %s97, 1
          %s1602 = scalar_lea.sflag [#allocation4], %s1601
          %s1603 = sand.u32 %s97, 1
          %s1604 = smul.addr %s1603, 8
          %s1605 = scalar_lea.vmem [#allocation5], %s1604
          %1606 = dma.done %s1602, 128
        $region48: #{tpu_custom_call.1} parent=43 // pred_fallthru
          _
      $region44: #{tpu_custom_call.1} parent=5 // pred_fallthru
        _
    $region6: #{tpu_custom_call.1} parent=1 // loop_footer
      %s19 = sadd.s32 1, %s15
    $region7: #{tpu_custom_call.1} parent=1 // loop_footer_branch
      %14 = sbr.rel target = $region3
    $region8: #{tpu_custom_call.1} parent=1 // loop_exit
      _
    %1607 = vsyncpa [#allocation3], 1
    %s1608 = scalar_lea.sflag [#allocation3], 1
    %1609 = vsyncpa %s1608, 1
    %1610 = vsyncpa [#allocation4], 1
    %s1611 = scalar_lea.sflag [#allocation4], 1
    %1612 = vsyncpa %s1611, 1

</llo_original>
